<compile_context>
chip_gen: v7x
topology: tpu7x:2x2x1
jax: 0.10.0
libtpu: 0.0.40
codegen_flags: <defaults>
</compile_context>

<pallas_src>
import functools

import jax
import jax.numpy as jnp
import numpy as np
from jax.experimental import pallas as pl
from jax.experimental.pallas import tpu as pltpu

_NEG_INF = -1e30
_LANE = 128
_SUBLANE = 8


def _round_up(x, m):
    return ((x + m - 1) // m) * m


# -----------------------------------------------------------------------------
# Kernel 1: sequential GRU recurrence (only the h-dependent part).
# -----------------------------------------------------------------------------
def gru_recurrence_kernel(gx_ref, w_hh_ref, b_hn_ref, h_out_ref, h_state):
    """
    gx_ref   : (TC, 3, B, H) f32  precomputed x@W_ih + folded biases (gate order r,z,n)
    w_hh_ref : (3, H, H)     bf16 hidden->gate weights, one aligned (H,H) block per gate
    b_hn_ref : (1, H)        f32  b_hh for the 'n' gate (cannot be folded: scaled by r)
    h_out_ref: (TC, B, H)    f32  hidden state for every timestep of this chunk
    h_state  : (B, H)        f32  VMEM-resident recurrent state, carried across chunks
    """
    @pl.when(pl.program_id(0) == 0)
    def _():
        h_state[...] = jnp.zeros_like(h_state)   # init_hidden -> zeros

    t_chunk = gx_ref.shape[0]

    # Hoist loop-invariant loads out of the time loop.
    w_r = w_hh_ref[0]
    w_z = w_hh_ref[1]
    w_n = w_hh_ref[2]
    b_n = b_hn_ref[...]

    def step(t, carry):
        h_prev = h_state[...]                                   # (B, H) f32
        h_bf = h_prev.astype(jnp.bfloat16)
        gh_r = jnp.dot(h_bf, w_r, preferred_element_type=jnp.float32)
        gh_z = jnp.dot(h_bf, w_z, preferred_element_type=jnp.float32)
        gh_n = jnp.dot(h_bf, w_n, preferred_element_type=jnp.float32) + b_n

        gx_t = gx_ref[t]                                        # (3, B, H)
        r = jax.nn.sigmoid(gx_t[0] + gh_r)
        z = jax.nn.sigmoid(gx_t[1] + gh_z)
        n = jnp.tanh(gx_t[2] + r * gh_n)
        h_new = (1.0 - z) * n + z * h_prev

        h_state[...] = h_new
        h_out_ref[t] = h_new
        return carry

    jax.lax.fori_loop(0, t_chunk, step, 0, unroll=True)


# -----------------------------------------------------------------------------
# Kernel 2: output projection + log_softmax, parallel over row tiles of (B*T, H).
# -----------------------------------------------------------------------------
def proj_logsoftmax_kernel(h_ref, w_ref, b_ref, out_ref):
    logits = jnp.dot(h_ref[...], w_ref[...],
                     preferred_element_type=jnp.float32) + b_ref[...]
    m = jnp.max(logits, axis=-1, keepdims=True)
    lse = jnp.log(jnp.sum(jnp.exp(logits - m), axis=-1, keepdims=True)) + m
    out_ref[...] = logits - lse


def generator_forward(x_tokens, params, *, t_chunk=None, row_tile=256):
    """Pallas-backed forward pass. Returns (B*T, V) log-probs in torch's row order."""
    emb_table, w_ih3, w_hh3, b_ih3, b_hh3, w_out, b_out = params
    B, T = x_tokens.shape
    H = w_hh3.shape[-1]
    V = w_out.shape[-1]

    if t_chunk is None:
        t_chunk = min(T, 32)
        while T % t_chunk:
            t_chunk -= 1
    assert T % t_chunk == 0
    num_chunks = T // t_chunk

    B_pad = _round_up(B, _SUBLANE)
    V_pad = _round_up(V, _LANE)

    # ---- Stage 0 (XLA glue): embedding gather + hoisted input projection -------
    emb_x = jnp.take(emb_table, x_tokens, axis=0)                     # (B, T, E)
    emb_x = jnp.pad(emb_x, ((0, B_pad - B), (0, 0), (0, 0)))
    emb_tbe = jnp.transpose(emb_x, (1, 0, 2)).astype(jnp.bfloat16)    # (T, Bp, E)

    # Fold b_hh into gx for the r and z gates (the n-gate b_hh is scaled by r).
    gx_bias = jnp.stack([b_ih3[0] + b_hh3[0],
                         b_ih3[1] + b_hh3[1],
                         b_ih3[2]], axis=0)                           # (3, H)
    gx = jnp.einsum('tbe,geh->tgbh', emb_tbe, w_ih3.astype(jnp.bfloat16),
                    preferred_element_type=jnp.float32)
    gx = gx + gx_bias[None, :, None, :]                               # (T, 3, Bp, H) f32

    # ---- Stage 1 (Pallas): sequential GRU recurrence over T-chunks -------------
    h_all = pl.pallas_call(
        gru_recurrence_kernel,
        out_shape=jax.ShapeDtypeStruct((T, B_pad, H), jnp.float32),
        grid=(num_chunks,),
        in_specs=[
            pl.BlockSpec((t_chunk, 3, B_pad, H), lambda c: (c, 0, 0, 0)),
            pl.BlockSpec((3, H, H), lambda c: (0, 0, 0)),
            pl.BlockSpec((1, H), lambda c: (0, 0)),
        ],
        out_specs=pl.BlockSpec((t_chunk, B_pad, H), lambda c: (c, 0, 0)),
        scratch_shapes=[pltpu.VMEM((B_pad, H), jnp.float32)],
        compiler_params=pltpu.CompilerParams(
            # Recurrence: the chunk axis carries h_state and MUST stay sequential.
            dimension_semantics=("arbitrary",),
            vmem_limit_bytes=48 * 1024 * 1024),
    )(gx, w_hh3.astype(jnp.bfloat16), b_hh3[2].reshape(1, H).astype(jnp.float32))

    # ---- Stage 2 (Pallas): parallel projection + log_softmax -------------------
    # Rows ordered exactly like torch's output.contiguous().view(-1, H): (b, t) major.
    h_rows = jnp.transpose(h_all, (1, 0, 2))[:B].reshape(B * T, H)
    R = B * T
    rt = row_tile if R >= row_tile else _round_up(R, _SUBLANE)
    R_pad = _round_up(R, rt)
    h_rows = jnp.pad(h_rows, ((0, R_pad - R), (0, 0))).astype(jnp.bfloat16)

    w_out_p = jnp.pad(w_out, ((0, 0), (0, V_pad - V))).astype(jnp.bfloat16)
    b_out_p = jnp.pad(b_out, (0, V_pad - V), constant_values=_NEG_INF)
    b_out_p = b_out_p.reshape(1, V_pad).astype(jnp.float32)

    pred_p = pl.pallas_call(
        proj_logsoftmax_kernel,
        out_shape=jax.ShapeDtypeStruct((R_pad, V_pad), jnp.float32),
        grid=(R_pad // rt,),
        in_specs=[
            pl.BlockSpec((rt, H), lambda i: (i, 0)),
            # TODO(synk): for very large vocab on v7x (64 MiB VMEM), tile the V axis
            # with an online logsumexp instead of keeping (H, V_pad) fully resident.
            pl.BlockSpec((H, V_pad), lambda i: (0, 0)),
            pl.BlockSpec((1, V_pad), lambda i: (0, 0)),
        ],
        out_specs=pl.BlockSpec((rt, V_pad), lambda i: (i, 0)),
        compiler_params=pltpu.CompilerParams(
            dimension_semantics=("parallel",),
            vmem_limit_bytes=48 * 1024 * 1024),
    )(h_rows, w_out_p, b_out_p)

    return pred_p[:R, :V]


def _reference_forward(x_tokens, params):
    """Pure-JAX reference (same bf16 matmul precision as the kernels)."""
    emb_table, w_ih3, w_hh3, b_ih3, b_hh3, w_out, b_out = params
    B, T = x_tokens.shape
    H = w_hh3.shape[-1]

    emb = jnp.take(emb_table, x_tokens, axis=0).astype(jnp.bfloat16)        # (B,T,E)
    gx = jnp.einsum('bte,geh->btgh', emb, w_ih3.astype(jnp.bfloat16),
                    preferred_element_type=jnp.float32) + b_ih3[None, None]

    w_hh_bf = w_hh3.astype(jnp.bfloat16)

    def step(h, gx_t):                                                      # gx_t (B,3,H)
        gh = jnp.einsum('bh,ghk->bgk', h.astype(jnp.bfloat16), w_hh_bf,
                        preferred_element_type=jnp.float32) + b_hh3[None]
        r = jax.nn.sigmoid(gx_t[:, 0] + gh[:, 0])
        z = jax.nn.sigmoid(gx_t[:, 1] + gh[:, 1])
        n = jnp.tanh(gx_t[:, 2] + r * gh[:, 2])
        h_new = (1.0 - z) * n + z * h
        return h_new, h_new

    h0 = jnp.zeros((B, H), jnp.float32)
    _, hs = jax.lax.scan(step, h0, jnp.transpose(gx, (1, 0, 2, 3)))         # (T,B,H)
    out = jnp.transpose(hs, (1, 0, 2)).reshape(B * T, H)
    logits = jnp.dot(out.astype(jnp.bfloat16), w_out.astype(jnp.bfloat16),
                     preferred_element_type=jnp.float32) + b_out[None]
    return jax.nn.log_softmax(logits, axis=-1)


def init_params(key, num_emb, emb_dim, hidden_dim):
    """uniform(-0.05, 0.05) init for every parameter, mirroring Generator.init_params().

    Weight layouts are pre-transposed / gate-split for the kernels:
      w_ih3 (3, E, H), w_hh3 (3, H, H) with PyTorch GRU gate order (r, z, n).
    (padding_idx is irrelevant after init_params() overwrites every weight uniformly.)
    """
    ks = jax.random.split(key, 7)
    u = lambda k, shape: jax.random.uniform(k, shape, jnp.float32, -0.05, 0.05)
    emb_table = u(ks[0], (num_emb, emb_dim))
    w_ih3 = u(ks[1], (3, emb_dim, hidden_dim))
    w_hh3 = u(ks[2], (3, hidden_dim, hidden_dim))
    b_ih3 = u(ks[3], (3, hidden_dim))
    b_hh3 = u(ks[4], (3, hidden_dim))
    w_out = u(ks[5], (hidden_dim, num_emb))
    b_out = u(ks[6], (num_emb,))
    return (emb_table, w_ih3, w_hh3, b_ih3, b_hh3, w_out, b_out)


if __name__ == "__main__":
    # Small, forward-consistent shapes.
    num_emb, emb_dim, hidden_dim = 32, 16, 32
    batch, seq_len = 2, 8

    key = jax.random.PRNGKey(0)
    k_params, k_tok = jax.random.split(key)
    params = init_params(k_params, num_emb, emb_dim, hidden_dim)
    x_tokens = jax.random.randint(k_tok, (batch, seq_len), 0, num_emb, dtype=jnp.int32)
    # x_da is unused by forward(); kept only for API parity.
    x_da = jnp.zeros((batch, seq_len), jnp.int32)

    fwd = jax.jit(functools.partial(generator_forward, t_chunk=4))  # 2 chunks: exercises the carry
    pred = jax.block_until_ready(fwd(x_tokens, params))

    ref = jax.block_until_ready(_reference_forward(x_tokens, params))
    np.testing.assert_allclose(np.asarray(pred), np.asarray(ref), rtol=2e-3, atol=2e-3)

    assert pred.shape == (batch * seq_len, num_emb)
    print("KERNEL_OK")
</pallas_src>

<mosaic_0001>
module attributes {stable_mosaic.version = 11 : i64} {
  func.func @gru_recurrence_kernel(%arg0: i32, %arg1: memref<4x3x8x32xf32, #tpu.memory_space<vmem>>, %arg2: memref<3x32x32xbf16, #tpu.memory_space<vmem>>, %arg3: memref<1x32xf32, #tpu.memory_space<vmem>>, %arg4: memref<4x8x32xf32, #tpu.memory_space<vmem>>, %arg5: memref<8x32xf32, #tpu.memory_space<vmem>>) attributes {dimension_semantics = [#tpu.dimension_semantics<arbitrary>], iteration_bounds = array<i64: 2>, scalar_prefetch = 0 : i64, scratch_operands = 1 : i64, tpu.core_type = #tpu.core_type<tc>, window_params = [{transform_indices = @transform_0, window_bounds = array<i64: 4, 3, 8, 32>}, {pipeline_mode = #tpu.pipeline_mode<synchronous>, transform_indices = @transform_1, window_bounds = array<i64: 3, 32, 32>}, {pipeline_mode = #tpu.pipeline_mode<synchronous>, transform_indices = @transform_2, window_bounds = array<i64: 1, 32>}, {transform_indices = @transform_3, window_bounds = array<i64: 4, 8, 32>}]} {
    %c0_i32 = arith.constant 0 : i32
    %0 = arith.cmpi eq, %arg0, %c0_i32 : i32
    %1 = arith.extui %0 : i1 to i32
    %c0_i32_0 = arith.constant 0 : i32
    %2 = arith.cmpi ne, %1, %c0_i32_0 : i32
    scf.if %2 {
      %cst_69 = arith.constant 0.000000e+00 : f32
      %174 = vector.broadcast %cst_69 : f32 to vector<8x32xf32>
      %c0_70 = arith.constant 0 : index
      %c0_71 = arith.constant 0 : index
      %175 = vector.load %arg5[%c0_70, %c0_71] : memref<8x32xf32, #tpu.memory_space<vmem>>, vector<8x32xf32>
      tpu.vector_store %arg5[%c0_70, %c0_71], %174 {strides = array<i32>} : memref<8x32xf32, #tpu.memory_space<vmem>>, vector<8x32xf32>,
    } else {
    }
    %c0 = arith.constant 0 : index
    %c0_1 = arith.constant 0 : index
    %c0_2 = arith.constant 0 : index
    %3 = vector.load %arg2[%c0, %c0_1, %c0_2] : memref<3x32x32xbf16, #tpu.memory_space<vmem>>, vector<1x32x32xbf16>
    %4 = vector.shape_cast %3 : vector<1x32x32xbf16> to vector<32x32xbf16>
    %c1 = arith.constant 1 : index
    %c0_3 = arith.constant 0 : index
    %c0_4 = arith.constant 0 : index
    %5 = vector.load %arg2[%c1, %c0_3, %c0_4] : memref<3x32x32xbf16, #tpu.memory_space<vmem>>, vector<1x32x32xbf16>
    %6 = vector.shape_cast %5 : vector<1x32x32xbf16> to vector<32x32xbf16>
    %c2 = arith.constant 2 : index
    %c0_5 = arith.constant 0 : index
    %c0_6 = arith.constant 0 : index
    %7 = vector.load %arg2[%c2, %c0_5, %c0_6] : memref<3x32x32xbf16, #tpu.memory_space<vmem>>, vector<1x32x32xbf16>
    %8 = vector.shape_cast %7 : vector<1x32x32xbf16> to vector<32x32xbf16>
    %c0_7 = arith.constant 0 : index
    %c0_8 = arith.constant 0 : index
    %9 = vector.load %arg3[%c0_7, %c0_8] : memref<1x32xf32, #tpu.memory_space<vmem>>, vector<1x32xf32>
    %c0_i32_9 = arith.constant 0 : i32
    %c0_10 = arith.constant 0 : index
    %c0_11 = arith.constant 0 : index
    %10 = vector.load %arg5[%c0_10, %c0_11] : memref<8x32xf32, #tpu.memory_space<vmem>>, vector<8x32xf32>
    %11 = arith.truncf %10 : vector<8x32xf32> to vector<8x32xbf16>
    %cst = arith.constant dense<0.000000e+00> : vector<8x32xf32>
    %12 = tpu.matmul %11, %4, %cst {dimension_numbers = #tpu.dot_dimension_numbers<[1], [0], [0], [1], [0, 0, 1, 1], [], []>} : vector<8x32xbf16>, vector<32x32xbf16>, vector<8x32xf32> -> vector<8x32xf32>
    %cst_12 = arith.constant dense<0.000000e+00> : vector<8x32xf32>
    %13 = tpu.matmul %11, %6, %cst_12 {dimension_numbers = #tpu.dot_dimension_numbers<[1], [0], [0], [1], [0, 0, 1, 1], [], []>} : vector<8x32xbf16>, vector<32x32xbf16>, vector<8x32xf32> -> vector<8x32xf32>
    %cst_13 = arith.constant dense<0.000000e+00> : vector<8x32xf32>
    %14 = tpu.matmul %11, %8, %cst_13 {dimension_numbers = #tpu.dot_dimension_numbers<[1], [0], [0], [1], [0, 0, 1, 1], [], []>} : vector<8x32xbf16>, vector<32x32xbf16>, vector<8x32xf32> -> vector<8x32xf32>
    %15 = vector.broadcast %9 : vector<1x32xf32> to vector<8x32xf32>
    %16 = arith.addf %14, %15 : vector<8x32xf32>
    %17 = arith.index_cast %c0_i32_9 : i32 to index
    %c0_14 = arith.constant 0 : index
    %c0_15 = arith.constant 0 : index
    %c0_16 = arith.constant 0 : index
    %18 = vector.load %arg1[%17, %c0_14, %c0_15, %c0_16] : memref<4x3x8x32xf32, #tpu.memory_space<vmem>>, vector<1x3x8x32xf32>
    %19 = vector.shape_cast %18 : vector<1x3x8x32xf32> to vector<3x8x32xf32>
    %20 = vector.extract_strided_slice %19 {offsets = [0, 0, 0], sizes = [1, 8, 32], strides = [1, 1, 1]} : vector<3x8x32xf32> to vector<1x8x32xf32>
    %21 = vector.shape_cast %20 : vector<1x8x32xf32> to vector<8x32xf32>
    %22 = arith.addf %21, %12 : vector<8x32xf32>
    %23 = arith.negf %22 : vector<8x32xf32>
    %24 = math.exp %23 : vector<8x32xf32>
    %cst_17 = arith.constant 1.000000e+00 : f32
    %25 = vector.broadcast %cst_17 : f32 to vector<8x32xf32>
    %26 = arith.addf %25, %24 : vector<8x32xf32>
    %27 = arith.divf %25, %26 : vector<8x32xf32>
    %28 = vector.extract_strided_slice %19 {offsets = [1, 0, 0], sizes = [1, 8, 32], strides = [1, 1, 1]} : vector<3x8x32xf32> to vector<1x8x32xf32>
    %29 = vector.shape_cast %28 : vector<1x8x32xf32> to vector<8x32xf32>
    %30 = arith.addf %29, %13 : vector<8x32xf32>
    %31 = arith.negf %30 : vector<8x32xf32>
    %32 = math.exp %31 : vector<8x32xf32>
    %cst_18 = arith.constant 1.000000e+00 : f32
    %33 = vector.broadcast %cst_18 : f32 to vector<8x32xf32>
    %34 = arith.addf %33, %32 : vector<8x32xf32>
    %35 = arith.divf %33, %34 : vector<8x32xf32>
    %36 = vector.extract_strided_slice %19 {offsets = [2, 0, 0], sizes = [1, 8, 32], strides = [1, 1, 1]} : vector<3x8x32xf32> to vector<1x8x32xf32>
    %37 = vector.shape_cast %36 : vector<1x8x32xf32> to vector<8x32xf32>
    %38 = arith.mulf %27, %16 : vector<8x32xf32>
    %39 = arith.addf %37, %38 : vector<8x32xf32>
    %40 = math.tanh %39 : vector<8x32xf32>
    %cst_19 = arith.constant 1.000000e+00 : f32
    %41 = vector.broadcast %cst_19 : f32 to vector<8x32xf32>
    %42 = arith.subf %41, %35 : vector<8x32xf32>
    %43 = arith.mulf %42, %40 : vector<8x32xf32>
    %44 = arith.mulf %35, %10 : vector<8x32xf32>
    %45 = arith.addf %43, %44 : vector<8x32xf32>
    %c0_20 = arith.constant 0 : index
    %c0_21 = arith.constant 0 : index
    %46 = vector.load %arg5[%c0_20, %c0_21] : memref<8x32xf32, #tpu.memory_space<vmem>>, vector<8x32xf32>
    tpu.vector_store %arg5[%c0_20, %c0_21], %45 {strides = array<i32>} : memref<8x32xf32, #tpu.memory_space<vmem>>, vector<8x32xf32>,
    %47 = arith.index_cast %c0_i32_9 : i32 to index
    %c0_22 = arith.constant 0 : index
    %c0_23 = arith.constant 0 : index
    %48 = vector.load %arg4[%47, %c0_22, %c0_23] : memref<4x8x32xf32, #tpu.memory_space<vmem>>, vector<1x8x32xf32>
    %49 = vector.shape_cast %48 : vector<1x8x32xf32> to vector<8x32xf32>
    %50 = vector.shape_cast %45 : vector<8x32xf32> to vector<1x8x32xf32>
    tpu.vector_store %arg4[%47, %c0_22, %c0_23], %50 {strides = array<i32>} : memref<4x8x32xf32, #tpu.memory_space<vmem>>, vector<1x8x32xf32>,
    %c1_i32 = arith.constant 1 : i32
    %c0_24 = arith.constant 0 : index
    %c0_25 = arith.constant 0 : index
    %51 = vector.load %arg5[%c0_24, %c0_25] : memref<8x32xf32, #tpu.memory_space<vmem>>, vector<8x32xf32>
    %52 = arith.truncf %51 : vector<8x32xf32> to vector<8x32xbf16>
    %cst_26 = arith.constant dense<0.000000e+00> : vector<8x32xf32>
    %53 = tpu.matmul %52, %4, %cst_26 {dimension_numbers = #tpu.dot_dimension_numbers<[1], [0], [0], [1], [0, 0, 1, 1], [], []>} : vector<8x32xbf16>, vector<32x32xbf16>, vector<8x32xf32> -> vector<8x32xf32>
    %cst_27 = arith.constant dense<0.000000e+00> : vector<8x32xf32>
    %54 = tpu.matmul %52, %6, %cst_27 {dimension_numbers = #tpu.dot_dimension_numbers<[1], [0], [0], [1], [0, 0, 1, 1], [], []>} : vector<8x32xbf16>, vector<32x32xbf16>, vector<8x32xf32> -> vector<8x32xf32>
    %cst_28 = arith.constant dense<0.000000e+00> : vector<8x32xf32>
    %55 = tpu.matmul %52, %8, %cst_28 {dimension_numbers = #tpu.dot_dimension_numbers<[1], [0], [0], [1], [0, 0, 1, 1], [], []>} : vector<8x32xbf16>, vector<32x32xbf16>, vector<8x32xf32> -> vector<8x32xf32>
    %56 = vector.broadcast %9 : vector<1x32xf32> to vector<8x32xf32>
    %57 = arith.addf %55, %56 : vector<8x32xf32>
    %58 = arith.index_cast %c1_i32 : i32 to index
    %c0_29 = arith.constant 0 : index
    %c0_30 = arith.constant 0 : index
    %c0_31 = arith.constant 0 : index
    %59 = vector.load %arg1[%58, %c0_29, %c0_30, %c0_31] : memref<4x3x8x32xf32, #tpu.memory_space<vmem>>, vector<1x3x8x32xf32>
    %60 = vector.shape_cast %59 : vector<1x3x8x32xf32> to vector<3x8x32xf32>
    %61 = vector.extract_strided_slice %60 {offsets = [0, 0, 0], sizes = [1, 8, 32], strides = [1, 1, 1]} : vector<3x8x32xf32> to vector<1x8x32xf32>
    %62 = vector.shape_cast %61 : vector<1x8x32xf32> to vector<8x32xf32>
    %63 = arith.addf %62, %53 : vector<8x32xf32>
    %64 = arith.negf %63 : vector<8x32xf32>
    %65 = math.exp %64 : vector<8x32xf32>
    %cst_32 = arith.constant 1.000000e+00 : f32
    %66 = vector.broadcast %cst_32 : f32 to vector<8x32xf32>
    %67 = arith.addf %66, %65 : vector<8x32xf32>
    %68 = arith.divf %66, %67 : vector<8x32xf32>
    %69 = vector.extract_strided_slice %60 {offsets = [1, 0, 0], sizes = [1, 8, 32], strides = [1, 1, 1]} : vector<3x8x32xf32> to vector<1x8x32xf32>
    %70 = vector.shape_cast %69 : vector<1x8x32xf32> to vector<8x32xf32>
    %71 = arith.addf %70, %54 : vector<8x32xf32>
    %72 = arith.negf %71 : vector<8x32xf32>
    %73 = math.exp %72 : vector<8x32xf32>
    %cst_33 = arith.constant 1.000000e+00 : f32
    %74 = vector.broadcast %cst_33 : f32 to vector<8x32xf32>
    %75 = arith.addf %74, %73 : vector<8x32xf32>
    %76 = arith.divf %74, %75 : vector<8x32xf32>
    %77 = vector.extract_strided_slice %60 {offsets = [2, 0, 0], sizes = [1, 8, 32], strides = [1, 1, 1]} : vector<3x8x32xf32> to vector<1x8x32xf32>
    %78 = vector.shape_cast %77 : vector<1x8x32xf32> to vector<8x32xf32>
    %79 = arith.mulf %68, %57 : vector<8x32xf32>
    %80 = arith.addf %78, %79 : vector<8x32xf32>
    %81 = math.tanh %80 : vector<8x32xf32>
    %cst_34 = arith.constant 1.000000e+00 : f32
    %82 = vector.broadcast %cst_34 : f32 to vector<8x32xf32>
    %83 = arith.subf %82, %76 : vector<8x32xf32>
    %84 = arith.mulf %83, %81 : vector<8x32xf32>
    %85 = arith.mulf %76, %51 : vector<8x32xf32>
    %86 = arith.addf %84, %85 : vector<8x32xf32>
    %c0_35 = arith.constant 0 : index
    %c0_36 = arith.constant 0 : index
    %87 = vector.load %arg5[%c0_35, %c0_36] : memref<8x32xf32, #tpu.memory_space<vmem>>, vector<8x32xf32>
    tpu.vector_store %arg5[%c0_35, %c0_36], %86 {strides = array<i32>} : memref<8x32xf32, #tpu.memory_space<vmem>>, vector<8x32xf32>,
    %88 = arith.index_cast %c1_i32 : i32 to index
    %c0_37 = arith.constant 0 : index
    %c0_38 = arith.constant 0 : index
    %89 = vector.load %arg4[%88, %c0_37, %c0_38] : memref<4x8x32xf32, #tpu.memory_space<vmem>>, vector<1x8x32xf32>
    %90 = vector.shape_cast %89 : vector<1x8x32xf32> to vector<8x32xf32>
    %91 = vector.shape_cast %86 : vector<8x32xf32> to vector<1x8x32xf32>
    tpu.vector_store %arg4[%88, %c0_37, %c0_38], %91 {strides = array<i32>} : memref<4x8x32xf32, #tpu.memory_space<vmem>>, vector<1x8x32xf32>,
    %c2_i32 = arith.constant 2 : i32
    %c0_39 = arith.constant 0 : index
    %c0_40 = arith.constant 0 : index
    %92 = vector.load %arg5[%c0_39, %c0_40] : memref<8x32xf32, #tpu.memory_space<vmem>>, vector<8x32xf32>
    %93 = arith.truncf %92 : vector<8x32xf32> to vector<8x32xbf16>
    %cst_41 = arith.constant dense<0.000000e+00> : vector<8x32xf32>
    %94 = tpu.matmul %93, %4, %cst_41 {dimension_numbers = #tpu.dot_dimension_numbers<[1], [0], [0], [1], [0, 0, 1, 1], [], []>} : vector<8x32xbf16>, vector<32x32xbf16>, vector<8x32xf32> -> vector<8x32xf32>
    %cst_42 = arith.constant dense<0.000000e+00> : vector<8x32xf32>
    %95 = tpu.matmul %93, %6, %cst_42 {dimension_numbers = #tpu.dot_dimension_numbers<[1], [0], [0], [1], [0, 0, 1, 1], [], []>} : vector<8x32xbf16>, vector<32x32xbf16>, vector<8x32xf32> -> vector<8x32xf32>
    %cst_43 = arith.constant dense<0.000000e+00> : vector<8x32xf32>
    %96 = tpu.matmul %93, %8, %cst_43 {dimension_numbers = #tpu.dot_dimension_numbers<[1], [0], [0], [1], [0, 0, 1, 1], [], []>} : vector<8x32xbf16>, vector<32x32xbf16>, vector<8x32xf32> -> vector<8x32xf32>
    %97 = vector.broadcast %9 : vector<1x32xf32> to vector<8x32xf32>
    %98 = arith.addf %96, %97 : vector<8x32xf32>
    %99 = arith.index_cast %c2_i32 : i32 to index
    %c0_44 = arith.constant 0 : index
    %c0_45 = arith.constant 0 : index
    %c0_46 = arith.constant 0 : index
    %100 = vector.load %arg1[%99, %c0_44, %c0_45, %c0_46] : memref<4x3x8x32xf32, #tpu.memory_space<vmem>>, vector<1x3x8x32xf32>
    %101 = vector.shape_cast %100 : vector<1x3x8x32xf32> to vector<3x8x32xf32>
    %102 = vector.extract_strided_slice %101 {offsets = [0, 0, 0], sizes = [1, 8, 32], strides = [1, 1, 1]} : vector<3x8x32xf32> to vector<1x8x32xf32>
    %103 = vector.shape_cast %102 : vector<1x8x32xf32> to vector<8x32xf32>
    %104 = arith.addf %103, %94 : vector<8x32xf32>
    %105 = arith.negf %104 : vector<8x32xf32>
    %106 = math.exp %105 : vector<8x32xf32>
    %cst_47 = arith.constant 1.000000e+00 : f32
    %107 = vector.broadcast %cst_47 : f32 to vector<8x32xf32>
    %108 = arith.addf %107, %106 : vector<8x32xf32>
    %109 = arith.divf %107, %108 : vector<8x32xf32>
    %110 = vector.extract_strided_slice %101 {offsets = [1, 0, 0], sizes = [1, 8, 32], strides = [1, 1, 1]} : vector<3x8x32xf32> to vector<1x8x32xf32>
    %111 = vector.shape_cast %110 : vector<1x8x32xf32> to vector<8x32xf32>
    %112 = arith.addf %111, %95 : vector<8x32xf32>
    %113 = arith.negf %112 : vector<8x32xf32>
    %114 = math.exp %113 : vector<8x32xf32>
    %cst_48 = arith.constant 1.000000e+00 : f32
    %115 = vector.broadcast %cst_48 : f32 to vector<8x32xf32>
    %116 = arith.addf %115, %114 : vector<8x32xf32>
    %117 = arith.divf %115, %116 : vector<8x32xf32>
    %118 = vector.extract_strided_slice %101 {offsets = [2, 0, 0], sizes = [1, 8, 32], strides = [1, 1, 1]} : vector<3x8x32xf32> to vector<1x8x32xf32>
    %119 = vector.shape_cast %118 : vector<1x8x32xf32> to vector<8x32xf32>
    %120 = arith.mulf %109, %98 : vector<8x32xf32>
    %121 = arith.addf %119, %120 : vector<8x32xf32>
    %122 = math.tanh %121 : vector<8x32xf32>
    %cst_49 = arith.constant 1.000000e+00 : f32
    %123 = vector.broadcast %cst_49 : f32 to vector<8x32xf32>
    %124 = arith.subf %123, %117 : vector<8x32xf32>
    %125 = arith.mulf %124, %122 : vector<8x32xf32>
    %126 = arith.mulf %117, %92 : vector<8x32xf32>
    %127 = arith.addf %125, %126 : vector<8x32xf32>
    %c0_50 = arith.constant 0 : index
    %c0_51 = arith.constant 0 : index
    %128 = vector.load %arg5[%c0_50, %c0_51] : memref<8x32xf32, #tpu.memory_space<vmem>>, vector<8x32xf32>
    tpu.vector_store %arg5[%c0_50, %c0_51], %127 {strides = array<i32>} : memref<8x32xf32, #tpu.memory_space<vmem>>, vector<8x32xf32>,
    %129 = arith.index_cast %c2_i32 : i32 to index
    %c0_52 = arith.constant 0 : index
    %c0_53 = arith.constant 0 : index
    %130 = vector.load %arg4[%129, %c0_52, %c0_53] : memref<4x8x32xf32, #tpu.memory_space<vmem>>, vector<1x8x32xf32>
    %131 = vector.shape_cast %130 : vector<1x8x32xf32> to vector<8x32xf32>
    %132 = vector.shape_cast %127 : vector<8x32xf32> to vector<1x8x32xf32>
    tpu.vector_store %arg4[%129, %c0_52, %c0_53], %132 {strides = array<i32>} : memref<4x8x32xf32, #tpu.memory_space<vmem>>, vector<1x8x32xf32>,
    %c3_i32 = arith.constant 3 : i32
    %c0_54 = arith.constant 0 : index
    %c0_55 = arith.constant 0 : index
    %133 = vector.load %arg5[%c0_54, %c0_55] : memref<8x32xf32, #tpu.memory_space<vmem>>, vector<8x32xf32>
    %134 = arith.truncf %133 : vector<8x32xf32> to vector<8x32xbf16>
    %cst_56 = arith.constant dense<0.000000e+00> : vector<8x32xf32>
    %135 = tpu.matmul %134, %4, %cst_56 {dimension_numbers = #tpu.dot_dimension_numbers<[1], [0], [0], [1], [0, 0, 1, 1], [], []>} : vector<8x32xbf16>, vector<32x32xbf16>, vector<8x32xf32> -> vector<8x32xf32>
    %cst_57 = arith.constant dense<0.000000e+00> : vector<8x32xf32>
    %136 = tpu.matmul %134, %6, %cst_57 {dimension_numbers = #tpu.dot_dimension_numbers<[1], [0], [0], [1], [0, 0, 1, 1], [], []>} : vector<8x32xbf16>, vector<32x32xbf16>, vector<8x32xf32> -> vector<8x32xf32>
    %cst_58 = arith.constant dense<0.000000e+00> : vector<8x32xf32>
    %137 = tpu.matmul %134, %8, %cst_58 {dimension_numbers = #tpu.dot_dimension_numbers<[1], [0], [0], [1], [0, 0, 1, 1], [], []>} : vector<8x32xbf16>, vector<32x32xbf16>, vector<8x32xf32> -> vector<8x32xf32>
    %138 = vector.broadcast %9 : vector<1x32xf32> to vector<8x32xf32>
    %139 = arith.addf %137, %138 : vector<8x32xf32>
    %140 = arith.index_cast %c3_i32 : i32 to index
    %c0_59 = arith.constant 0 : index
    %c0_60 = arith.constant 0 : index
    %c0_61 = arith.constant 0 : index
    %141 = vector.load %arg1[%140, %c0_59, %c0_60, %c0_61] : memref<4x3x8x32xf32, #tpu.memory_space<vmem>>, vector<1x3x8x32xf32>
    %142 = vector.shape_cast %141 : vector<1x3x8x32xf32> to vector<3x8x32xf32>
    %143 = vector.extract_strided_slice %142 {offsets = [0, 0, 0], sizes = [1, 8, 32], strides = [1, 1, 1]} : vector<3x8x32xf32> to vector<1x8x32xf32>
    %144 = vector.shape_cast %143 : vector<1x8x32xf32> to vector<8x32xf32>
    %145 = arith.addf %144, %135 : vector<8x32xf32>
    %146 = arith.negf %145 : vector<8x32xf32>
    %147 = math.exp %146 : vector<8x32xf32>
    %cst_62 = arith.constant 1.000000e+00 : f32
    %148 = vector.broadcast %cst_62 : f32 to vector<8x32xf32>
    %149 = arith.addf %148, %147 : vector<8x32xf32>
    %150 = arith.divf %148, %149 : vector<8x32xf32>
    %151 = vector.extract_strided_slice %142 {offsets = [1, 0, 0], sizes = [1, 8, 32], strides = [1, 1, 1]} : vector<3x8x32xf32> to vector<1x8x32xf32>
    %152 = vector.shape_cast %151 : vector<1x8x32xf32> to vector<8x32xf32>
    %153 = arith.addf %152, %136 : vector<8x32xf32>
    %154 = arith.negf %153 : vector<8x32xf32>
    %155 = math.exp %154 : vector<8x32xf32>
    %cst_63 = arith.constant 1.000000e+00 : f32
    %156 = vector.broadcast %cst_63 : f32 to vector<8x32xf32>
    %157 = arith.addf %156, %155 : vector<8x32xf32>
    %158 = arith.divf %156, %157 : vector<8x32xf32>
    %159 = vector.extract_strided_slice %142 {offsets = [2, 0, 0], sizes = [1, 8, 32], strides = [1, 1, 1]} : vector<3x8x32xf32> to vector<1x8x32xf32>
    %160 = vector.shape_cast %159 : vector<1x8x32xf32> to vector<8x32xf32>
    %161 = arith.mulf %150, %139 : vector<8x32xf32>
    %162 = arith.addf %160, %161 : vector<8x32xf32>
    %163 = math.tanh %162 : vector<8x32xf32>
    %cst_64 = arith.constant 1.000000e+00 : f32
    %164 = vector.broadcast %cst_64 : f32 to vector<8x32xf32>
    %165 = arith.subf %164, %158 : vector<8x32xf32>
    %166 = arith.mulf %165, %163 : vector<8x32xf32>
    %167 = arith.mulf %158, %133 : vector<8x32xf32>
    %168 = arith.addf %166, %167 : vector<8x32xf32>
    %c0_65 = arith.constant 0 : index
    %c0_66 = arith.constant 0 : index
    %169 = vector.load %arg5[%c0_65, %c0_66] : memref<8x32xf32, #tpu.memory_space<vmem>>, vector<8x32xf32>
    tpu.vector_store %arg5[%c0_65, %c0_66], %168 {strides = array<i32>} : memref<8x32xf32, #tpu.memory_space<vmem>>, vector<8x32xf32>,
    %170 = arith.index_cast %c3_i32 : i32 to index
    %c0_67 = arith.constant 0 : index
    %c0_68 = arith.constant 0 : index
    %171 = vector.load %arg4[%170, %c0_67, %c0_68] : memref<4x8x32xf32, #tpu.memory_space<vmem>>, vector<1x8x32xf32>
    %172 = vector.shape_cast %171 : vector<1x8x32xf32> to vector<8x32xf32>
    %173 = vector.shape_cast %168 : vector<8x32xf32> to vector<1x8x32xf32>
    tpu.vector_store %arg4[%170, %c0_67, %c0_68], %173 {strides = array<i32>} : memref<4x8x32xf32, #tpu.memory_space<vmem>>, vector<1x8x32xf32>,
    %c4_i32 = arith.constant 4 : i32
    return
  }
  func.func @transform_0(%arg0: i32) -> (i32, i32, i32, i32) {
    %c0_i32 = arith.constant 0 : i32
    %c0_i32_0 = arith.constant 0 : i32
    %c0_i32_1 = arith.constant 0 : i32
    %c0_i32_2 = arith.constant 0 : i32
    return %arg0, %c0_i32, %c0_i32_0, %c0_i32_1 : i32, i32, i32, i32
  }
  func.func @transform_1(%arg0: i32) -> (i32, i32, i32) {
    %c0_i32 = arith.constant 0 : i32
    %c0_i32_0 = arith.constant 0 : i32
    %c0_i32_1 = arith.constant 0 : i32
    %c0_i32_2 = arith.constant 0 : i32
    return %c0_i32, %c0_i32_0, %c0_i32_1 : i32, i32, i32
  }
  func.func @transform_2(%arg0: i32) -> (i32, i32) {
    %c0_i32 = arith.constant 0 : i32
    %c0_i32_0 = arith.constant 0 : i32
    %c0_i32_1 = arith.constant 0 : i32
    return %c0_i32, %c0_i32_0 : i32, i32
  }
  func.func @transform_3(%arg0: i32) -> (i32, i32, i32) {
    %c0_i32 = arith.constant 0 : i32
    %c0_i32_0 = arith.constant 0 : i32
    %c0_i32_1 = arith.constant 0 : i32
    return %arg0, %c0_i32, %c0_i32_0 : i32, i32, i32
  }
}

module attributes {stable_mosaic.version = 11 : i64} {
  func.func @proj_logsoftmax_kernel(%arg0: i32, %arg1: memref<16x32xbf16, #tpu.memory_space<vmem>>, %arg2: memref<32x128xbf16, #tpu.memory_space<vmem>>, %arg3: memref<1x128xf32, #tpu.memory_space<vmem>>, %arg4: memref<16x128xf32, #tpu.memory_space<vmem>>) attributes {dimension_semantics = [#tpu.dimension_semantics<parallel>], iteration_bounds = array<i64: 1>, scalar_prefetch = 0 : i64, scratch_operands = 0 : i64, tpu.core_type = #tpu.core_type<tc>, window_params = [{transform_indices = @transform_0, window_bounds = array<i64: 16, 32>}, {pipeline_mode = #tpu.pipeline_mode<synchronous>, transform_indices = @transform_1, window_bounds = array<i64: 32, 128>}, {pipeline_mode = #tpu.pipeline_mode<synchronous>, transform_indices = @transform_2, window_bounds = array<i64: 1, 128>}, {transform_indices = @transform_3, window_bounds = array<i64: 16, 128>}]} {
    %c0 = arith.constant 0 : index
    %c0_0 = arith.constant 0 : index
    %0 = vector.load %arg1[%c0, %c0_0] : memref<16x32xbf16, #tpu.memory_space<vmem>>, vector<16x32xbf16>
    %c0_1 = arith.constant 0 : index
    %c0_2 = arith.constant 0 : index
    %1 = vector.load %arg2[%c0_1, %c0_2] : memref<32x128xbf16, #tpu.memory_space<vmem>>, vector<32x128xbf16>
    %cst = arith.constant dense<0.000000e+00> : vector<16x128xf32>
    %2 = tpu.matmul %0, %1, %cst {dimension_numbers = #tpu.dot_dimension_numbers<[1], [0], [0], [1], [0, 0, 1, 1], [], []>} : vector<16x32xbf16>, vector<32x128xbf16>, vector<16x128xf32> -> vector<16x128xf32>
    %c0_3 = arith.constant 0 : index
    %c0_4 = arith.constant 0 : index
    %3 = vector.load %arg3[%c0_3, %c0_4] : memref<1x128xf32, #tpu.memory_space<vmem>>, vector<1x128xf32>
    %4 = vector.broadcast %3 : vector<1x128xf32> to vector<16x128xf32>
    %5 = arith.addf %2, %4 : vector<16x128xf32>
    %cst_5 = arith.constant dense<0xFF800000> : vector<16xf32>
    %6 = vector.multi_reduction <maximumf>, %5, %cst_5 [1] : vector<16x128xf32> to vector<16xf32>
    %7 = vector.shape_cast %6 : vector<16xf32> to vector<16x1xf32>
    %8 = vector.broadcast %7 : vector<16x1xf32> to vector<16x128xf32>
    %9 = arith.subf %5, %8 : vector<16x128xf32>
    %10 = math.exp %9 : vector<16x128xf32>
    %cst_6 = arith.constant dense<0.000000e+00> : vector<16xf32>
    %11 = vector.multi_reduction <add>, %10, %cst_6 [1] : vector<16x128xf32> to vector<16xf32>
    %12 = vector.shape_cast %11 : vector<16xf32> to vector<16x1xf32>
    %13 = math.log %12 : vector<16x1xf32>
    %14 = arith.addf %13, %7 : vector<16x1xf32>
    %15 = vector.broadcast %14 : vector<16x1xf32> to vector<16x128xf32>
    %16 = arith.subf %5, %15 : vector<16x128xf32>
    %c0_7 = arith.constant 0 : index
    %c0_8 = arith.constant 0 : index
    %17 = vector.load %arg4[%c0_7, %c0_8] : memref<16x128xf32, #tpu.memory_space<vmem>>, vector<16x128xf32>
    tpu.vector_store %arg4[%c0_7, %c0_8], %16 {strides = array<i32>} : memref<16x128xf32, #tpu.memory_space<vmem>>, vector<16x128xf32>,
    return
  }
  func.func @transform_0(%arg0: i32) -> (i32, i32) {
    %c0_i32 = arith.constant 0 : i32
    %c0_i32_0 = arith.constant 0 : i32
    return %arg0, %c0_i32 : i32, i32
  }
  func.func @transform_1(%arg0: i32) -> (i32, i32) {
    %c0_i32 = arith.constant 0 : i32
    %c0_i32_0 = arith.constant 0 : i32
    %c0_i32_1 = arith.constant 0 : i32
    return %c0_i32, %c0_i32_0 : i32, i32
  }
  func.func @transform_2(%arg0: i32) -> (i32, i32) {
    %c0_i32 = arith.constant 0 : i32
    %c0_i32_0 = arith.constant 0 : i32
    %c0_i32_1 = arith.constant 0 : i32
    return %c0_i32, %c0_i32_0 : i32, i32
  }
  func.func @transform_3(%arg0: i32) -> (i32, i32) {
    %c0_i32 = arith.constant 0 : i32
    %c0_i32_0 = arith.constant 0 : i32
    return %arg0, %c0_i32 : i32, i32
  }
}

</mosaic_0001>

<llo_original>
// kernel: generator_forward.3
$region0: #{generator_forward.3}
  #allocation0 [shape = 'u32[]', space=smem, size = 0x4, offset = 0x4, fixed_abs, tag = 'smem constant byte address 0x4 - core index']
  #allocation1 [shape = 'u32[144,128]{1,0:T(1,128)}', space=vmem, size = 0x12000, scoped, tag = 'internal scratch']
  %s0 = inlined_call_operand.vmem [shape: bf16[16,32], index: 0, kind: input, shape index: {}]
  %s1 = inlined_call_operand.vmem [shape: bf16[32,128], index: 1, kind: input, shape index: {}]
  %s2 = inlined_call_operand.vmem [shape: f32[1,128], index: 2, kind: input, shape index: {}]
  %s3 = inlined_call_operand.hbm [shape: f32[16,128], index: 3, kind: output, shape index: {}]
  %s4 = sld [smem:[#allocation0]]
  $region22: #{generator_forward.3} parent=0
    _
  %s6 = ssub.s32 1, %s4
  %s7 = scalar_select 0, %s6, %s4
  $region1: #{generator_forward.3} parent=0
    #allocation2 [shape = 'u8[8192]{0}', space=vmem, size = 0x2000, scoped, tag = 'output window, operand 0, single buffered']
    #allocation3 [shape = 's32[1]{0}', space=sflag, size = 0x4, scoped, tag = 'scoped memory for generator_forward.3']
    %8 = vsyncpa [#allocation3], 0
    // Predicated region
    $region2: #{generator_forward.3} parent=1 // pred_check
      _
    $region3: #{generator_forward.3} parent=1 // pred_check_branch
      %10 = sbr.rel (0) target = $region5
    $region4: #{generator_forward.3} parent=1 // pred_region
      _
    $region5: #{generator_forward.3} parent=1 // pred_fallthru
      _
    // Predicated region
    $region6: #{generator_forward.3} parent=1 // pred_check
      _
    $region7: #{generator_forward.3} parent=1 // pred_check_branch
      %12 = sbr.rel (0) target = $region9
    $region8: #{generator_forward.3} parent=1 // pred_region
      _
    $region9: #{generator_forward.3} parent=1 // pred_fallthru
      _
    // Predicated region
    $region10: #{generator_forward.3} parent=1 // pred_check
      _
    $region11: #{generator_forward.3} parent=1 // pred_check_branch
      %14 = sbr.rel (0) target = $region13
    $region12: #{generator_forward.3} parent=1 // pred_region
      _
    $region13: #{generator_forward.3} parent=1 // pred_fallthru
      _
    %v16 = vld [vmem:[%s0] sm:$0xf]
    %v17 = vld [vmem:[%s0 + $0x4] sm:$0xf]
    %v18 = vld [vmem:[%s1] sm:$0xf]
    %v19 = vld [vmem:[%s1 + $0x4] sm:$0xf]
    %v20 = vld [vmem:[%s1 + $0x8] sm:$0xf]
    %v21 = vld [vmem:[%s1 + $0xc] sm:$0xf]
    %v22 = vld [vmem:[%s2] sm:$0x1]
    %v24 = vlaneseq
    %v25 = vshrl.u32 %v24, 7
    %v26 = vsub.s32 0, %v25
    %v27 = vrot.slane %v22, %v26
    %v31 = vunpack.c.l.b16 %v16
    %v32 = vunpack.c.l.b16 %v17
    %v33 = vpack.c.b16 %v32, %v31
    %v38 = vunpack.c.l.b16 %v18
    %v39 = vunpack.c.l.b16 %v19
    %v40 = vunpack.c.l.b16 %v20
    %v41 = vunpack.c.l.b16 %v21
    %v42 = vpack.c.b16 %v39, %v38
    %v43 = vpack.c.b16 %v41, %v40
    %vm46 = vcmask 261120
    %v48 = vsel %vm46, %v33, 0
    %50 = vmatprep.subr.bf16.mxu0 0
    %51 = vmatpush1.bf16.msra.mxu0 %v42
    %52 = vmatprep.subr.bf16.mxu0 0
    %53 = vmatpush1.bf16.msra.mxu0 %v43
    %54 = vmatprep.subr.bf16.mxu0 0
    %55 = vmatpush1.bf16.msra.mxu0 0
    %56 = vmatprep.subr.bf16.mxu0 0
    %57 = vmatpush1.bf16.msra.mxu0 0
    %58 = vmatprep.subr.bf16.mxu0 0
    %59 = vmatpush1.bf16.msra.mxu0 0
    %60 = vmatprep.subr.bf16.mxu0 0
    %61 = vmatpush1.bf16.msra.mxu0 0
    %62 = vmatprep.subr.bf16.mxu0 0
    %63 = vmatpush1.bf16.msra.mxu0 0
    %64 = vmatprep.subr.bf16.mxu0 0
    %65 = vmatpush1.bf16.msra.mxu0 0
    %66 = vmatprep.subr.bf16.mxu0 0
    %67 = vmatpush1.bf16.msra.mxu0 0
    %68 = vmatprep.subr.bf16.mxu0 0
    %69 = vmatpush1.bf16.msra.mxu0 0
    %70 = vmatprep.subr.bf16.mxu0 0
    %71 = vmatpush1.bf16.msra.mxu0 0
    %72 = vmatprep.subr.bf16.mxu0 0
    %73 = vmatpush1.bf16.msra.mxu0 0
    %74 = vmatprep.subr.bf16.mxu0 0
    %75 = vmatpush1.bf16.msra.mxu0 0
    %76 = vmatprep.subr.bf16.mxu0 0
    %77 = vmatpush1.bf16.msra.mxu0 0
    %78 = vmatprep.subr.bf16.mxu0 0
    %79 = vmatpush1.bf16.msra.mxu0 0
    %80 = vmatprep.subr.bf16.mxu0 0
    %81 = vmatpush1.bf16.msra.mxu0 0
    %82 = vmatprep.mubr.bf16.mxu0 0
    %83 = vmatmul.mubr.bf16.gmra.mrb[0].mxu0 %v48
    %v84 = vpop.f32.mrb[0].mxu0
    %v85 = vadd.f32 %v27, %v84
    %v86 = vpop.f32.mrb[0].mxu0
    %v87 = vpop.f32.mrb[0].mxu0
    %v88 = vadd.f32 %v27, %v87
    %v89 = vpop.f32.mrb[0].mxu0
    %90 = vdwg.mxu0
    %91 = vmax.xlane.f32.xlu0 %v85
    %v92 = vpop.xlane.xlu0 %91
    %93 = vmax.xlane.f32.xlu0 %v88
    %v94 = vpop.xlane.xlu0 %93
    %v95 = vsub.f32 %v85, %v92
    %v96 = vsub.f32 %v88, %v94
    %v97 = vmul.f32 %v95, 1.442695
    %v98 = vpow.pop %v97
    %v99 = vmul.f32 %v96, 1.442695
    %v100 = vpow.pop %v99
    %101 = vadd.xlane.f32.xlu0 %v98
    %v102 = vpop.xlane.xlu0 %101
    %103 = vadd.xlane.f32.xlu0 %v100
    %v104 = vpop.xlane.xlu0 %103
    %v105 = vlog2.pop %v102
    %v106 = vmul.f32 %v105, 0.6931472
    %v107 = vlog2.pop %v104
    %v108 = vmul.f32 %v107, 0.6931472
    %v109 = vadd.f32 %v106, %v92
    %v110 = vadd.f32 %v108, %v94
    %v111 = vsub.f32 %v85, %v109
    %v112 = vsub.f32 %v88, %v110
    %113 = vst [vmem:[#allocation2] sm:$0xff] %v111
    %114 = vst [vmem:[#allocation2 + $0x8] sm:$0xff] %v112
    // Predicated region
    $region14: #{generator_forward.3} parent=1 // pred_check
      _
    $region15: #{generator_forward.3} parent=1 // pred_check_branch
      %116 = sbr.rel (0) target = $region17
    $region16: #{generator_forward.3} parent=1 // pred_region
      %s118 = ssub.s32 256, 256
      %119 = vsyncadd [#allocation3], %s118
      %s120 = sshll.u32 [#allocation2], 4
      %s121 = int_to_ptr.vmem [resolvable:$true] %s120
      %126 = dma.vmem_to_hbm [thread:$0]  %s121, 256, %s3, [#allocation3], 128, 128, 8
    $region17: #{generator_forward.3} parent=1 // pred_fallthru
      _
    // Predicated region
    $region18: #{generator_forward.3} parent=1 // pred_check
      _
    $region19: #{generator_forward.3} parent=1 // pred_check_branch
      %128 = sbr.rel (0) target = $region21
    $region20: #{generator_forward.3} parent=1 // pred_region
      %129 = dma.done [#allocation3], 256
    $region21: #{generator_forward.3} parent=1 // pred_fallthru
      _
    %130 = vsyncpa [#allocation3], 1

// kernel: generator_forward.2
$region0: #{generator_forward.2}
  #allocation0 [shape = 'u32[]', space=smem, size = 0x4, offset = 0x4, fixed_abs, tag = 'smem constant byte address 0x4 - core index']
  #allocation1 [shape = 'u32[144,128]{1,0:T(1,128)}', space=vmem, size = 0x12000, scoped, tag = 'internal scratch']
  #allocation2 [shape = 'f32[8,32]{1,0:T(8,128)}', space=vmem, size = 0x1000, scoped, tag = 'scratch operand']
  %s0 = inlined_call_operand.vmem [shape: f32[8,3,8,32], index: 0, kind: input, shape index: {}]
  %s1 = inlined_call_operand.vmem [shape: bf16[3,32,32], index: 1, kind: input, shape index: {}]
  %s2 = inlined_call_operand.vmem [shape: f32[1,32], index: 2, kind: input, shape index: {}]
  %s3 = inlined_call_operand.vmem [shape: f32[8,8,32], index: 3, kind: output, shape index: {}]
  %s4 = sld [smem:[#allocation0]]
  $region49: #{generator_forward.2} parent=0
    _
  %s6 = ssub.s32 1, %s4
  %s7 = scalar_select 0, %s6, %s4
  loop: start=0, step=1, limit=4
  $region2: #{generator_forward.2} parent=0 // loop_pre_header
    _
  $region3: #{generator_forward.2} parent=0 // loop_header
    %s9 = sphi 0, %s13
    %p10 = scmp.ge.s32.totalorder %s9, 4
    %s19 = sphi 0, %s21
    %s22 = sphi 0, %s19
    %s23 = sphi 0, %s22
    %s39 = sphi 0, %s23
    %s43 = sphi 0, %s43
    %s45 = sphi 0, %s43
    %s46 = sphi 0, %s45
    %s60 = sphi 0, %s46
    %s64 = sphi 0, %s64
    %s66 = sphi 0, %s64
    %s67 = sphi 0, %s66
    %s81 = sphi 0, %s67
    %s87 = sphi 0, %s89
    %s90 = sphi 0, %s87
    %s91 = sphi 0, %s90
    %s107 = sphi 0, %s91
  $region4: #{generator_forward.2} parent=0 // loop_header_branch
    %12 = sbr.rel (%p10) target = $region8
  $region5: #{generator_forward.2} parent=0 // loop_body
    %s14 = ssub.s32 %s9, 1
    %s15 = ssub.s32 %s9, 2
    %s16 = sadd.s32 %s9, 1
    %s17 = ssub.s32 %s9, %s16
    %p18 = scmp.eq.s32.totalorder %s17, 0
    %s20 = sadd.s32 %s19, 1
    %s21 = scalar_select %p18, %s19, %s20
    %p24 = pneg %p18
    %p25 = scmp.eq.s32.totalorder %s9, 1
    %p26 = por %p24, %p25
    %p27 = scmp.ne.s32.totalorder %s19, %s22
    %p28 = scmp.eq.s32.totalorder %s9, 0
    %p29 = por %p27, %p28
    %p30 = scmp.ne.s32.totalorder %s19, %s22
    %p31 = scmp.eq.s32.totalorder %s14, 1
    %p32 = por %p30, %p31
    %p33 = scmp.ne.s32.totalorder %s22, %s23
    %p34 = scmp.eq.s32.totalorder %s14, 0
    %p35 = por %p33, %p34
    %p36 = scmp.ne.s32.totalorder %s22, %s23
    %p37 = scmp.eq.s32.totalorder %s15, 1
    %p38 = por %p36, %p37
    %p40 = scmp.ne.s32.totalorder %s23, %s39
    %p41 = scmp.eq.s32.totalorder %s15, 0
    %p42 = por %p40, %p41
    %s44 = sadd.s32 %s43, 1
    %p47 = scmp.eq.s32.totalorder %s9, 1
    %p48 = scmp.ne.s32.totalorder %s43, %s45
    %p49 = scmp.eq.s32.totalorder %s9, 0
    %p50 = por %p48, %p49
    %p51 = scmp.ne.s32.totalorder %s43, %s45
    %p52 = scmp.eq.s32.totalorder %s14, 1
    %p53 = por %p51, %p52
    %p54 = scmp.ne.s32.totalorder %s45, %s46
    %p55 = scmp.eq.s32.totalorder %s14, 0
    %p56 = por %p54, %p55
    %p57 = scmp.ne.s32.totalorder %s45, %s46
    %p58 = scmp.eq.s32.totalorder %s15, 1
    %p59 = por %p57, %p58
    %p61 = scmp.ne.s32.totalorder %s46, %s60
    %p62 = scmp.eq.s32.totalorder %s15, 0
    %p63 = por %p61, %p62
    %s65 = sadd.s32 %s64, 1
    %p68 = scmp.eq.s32.totalorder %s9, 1
    %p69 = scmp.ne.s32.totalorder %s64, %s66
    %p70 = scmp.eq.s32.totalorder %s9, 0
    %p71 = por %p69, %p70
    %p72 = scmp.ne.s32.totalorder %s64, %s66
    %p73 = scmp.eq.s32.totalorder %s14, 1
    %p74 = por %p72, %p73
    %p75 = scmp.ne.s32.totalorder %s66, %s67
    %p76 = scmp.eq.s32.totalorder %s14, 0
    %p77 = por %p75, %p76
    %p78 = scmp.ne.s32.totalorder %s66, %s67
    %p79 = scmp.eq.s32.totalorder %s15, 1
    %p80 = por %p78, %p79
    %p82 = scmp.ne.s32.totalorder %s67, %s81
    %p83 = scmp.eq.s32.totalorder %s15, 0
    %p84 = por %p82, %p83
    %s85 = ssub.s32 %s9, %s16
    %p86 = scmp.eq.s32.totalorder %s85, 0
    %s88 = sadd.s32 %s87, 1
    %s89 = scalar_select %p86, %s87, %s88
    %p92 = pneg %p86
    %p93 = scmp.eq.s32.totalorder %s9, 1
    %p94 = por %p92, %p93
    %p95 = scmp.ne.s32.totalorder %s87, %s90
    %p96 = scmp.eq.s32.totalorder %s9, 0
    %p97 = por %p95, %p96
    %p98 = scmp.ne.s32.totalorder %s87, %s90
    %p99 = scmp.eq.s32.totalorder %s14, 1
    %p100 = por %p98, %p99
    %p101 = scmp.ne.s32.totalorder %s90, %s91
    %p102 = scmp.eq.s32.totalorder %s14, 0
    %p103 = por %p101, %p102
    %p104 = scmp.ne.s32.totalorder %s90, %s91
    %p105 = scmp.eq.s32.totalorder %s15, 1
    %p106 = por %p104, %p105
    %p108 = scmp.ne.s32.totalorder %s91, %s107
    %p109 = scmp.eq.s32.totalorder %s15, 0
    %p110 = por %p108, %p109
    %p111 = scmp.le.s32.totalorder 1, %s9
    %p112 = scmp.lt.s32.totalorder %s9, 3
    %p113 = pnand %p111, %p112
    %p114 = pneg %p113
    // Predicated region
    $region9: #{generator_forward.2} parent=5 // pred_check
      _
    $region10: #{generator_forward.2} parent=5 // pred_check_branch
      %116 = sbr.rel (%p113) target = $region12
    $region11: #{generator_forward.2} parent=5 // pred_region
      %s117 = ssub.s32 %s9, 1
      // Predicated region
      $region13: #{generator_forward.2} parent=11 // pred_check
        %p118 = pneg %p56
      $region14: #{generator_forward.2} parent=11 // pred_check_branch
        %120 = sbr.rel (%p118) target = $region16
      $region15: #{generator_forward.2} parent=11 // pred_region
        _
      $region16: #{generator_forward.2} parent=11 // pred_fallthru
        _
      // Predicated region
      $region17: #{generator_forward.2} parent=11 // pred_check
        %p121 = pneg %p77
      $region18: #{generator_forward.2} parent=11 // pred_check_branch
        %123 = sbr.rel (%p121) target = $region20
      $region19: #{generator_forward.2} parent=11 // pred_region
        _
      $region20: #{generator_forward.2} parent=11 // pred_fallthru
        _
    $region12: #{generator_forward.2} parent=5 // pred_fallthru
      _
    %p124 = scmp.lt.s32.totalorder %s9, 2
    // Predicated region
    $region21: #{generator_forward.2} parent=5 // pred_check
      %p125 = pneg %p124
    $region22: #{generator_forward.2} parent=5 // pred_check_branch
      %127 = sbr.rel (%p125) target = $region24
    $region23: #{generator_forward.2} parent=5 // pred_region
      // Predicated region
      $region25: #{generator_forward.2} parent=23 // pred_check
        %p128 = pneg %p29
      $region26: #{generator_forward.2} parent=23 // pred_check_branch
        %130 = sbr.rel (%p128) target = $region28
      $region27: #{generator_forward.2} parent=23 // pred_region
        %s131 = smul.u32 4, %s9
        %p132 = scmp.lt.s32.totalorder %s131, 7
        %s133 = scalar_select %p132, %s131, 7
        %s134 = smul.addr %s133, 3
        %s135 = smul.addr %s134, 8
        %s136 = scalar_lea.vmem %s0, %s135
        %s137 = smul.u32 4, %s9
      $region28: #{generator_forward.2} parent=23 // pred_fallthru
        _
    $region24: #{generator_forward.2} parent=5 // pred_fallthru
      _
    %p138 = scmp.le.s32.totalorder 1, %s9
    %p139 = scmp.lt.s32.totalorder %s9, 3
    %p140 = pnand %p138, %p139
    %p141 = pneg %p140
    // Predicated region
    $region29: #{generator_forward.2} parent=5 // pred_check
      _
    $region30: #{generator_forward.2} parent=5 // pred_check_branch
      %143 = sbr.rel (%p140) target = $region32
    $region31: #{generator_forward.2} parent=5 // pred_region
      %s144 = ssub.s32 %s9, 1
      %s145 = smul.u32 4, %s14
      %p146 = scmp.lt.s32.totalorder %s145, 7
      %s147 = scalar_select %p146, %s145, 7
      %s148 = smul.addr %s147, 3
      %s149 = smul.addr %s148, 8
      %s150 = scalar_lea.vmem %s0, %s149
      %p151 = pneg %p35
      %p152 = pneg %p32
      %p153 = pneg %p56
      %p154 = pneg %p53
      %p155 = pneg %p77
      %p156 = pneg %p74
      %p157 = pneg %p103
      %p158 = pneg %p100
      %s159 = smul.u32 4, %s14
      %p160 = scmp.lt.s32.totalorder %s159, 7
      %s161 = scalar_select %p160, %s159, 7
      %s162 = smul.addr %s161, 8
      %s163 = scalar_lea.vmem %s3, %s162
      %s164 = smul.u32 4, %s14
      %p165 = scmp.lt.s32.totalorder %s164, 7
      %s166 = scalar_select %p165, %s164, 7
      %s167 = smul.addr %s166, 3
      %s168 = smul.addr %s167, 8
      %s169 = scalar_lea.vmem %s0, %s168
      %s170 = smul.u32 4, %s14
      %s171 = smul.u32 4, %s14
      %p172 = scmp.lt.s32.totalorder %s171, 7
      %s173 = scalar_select %p172, %s171, 7
      %s174 = smul.addr %s173, 8
      %s175 = scalar_lea.vmem %s3, %s174
      %s176 = smul.u32 4, %s14
      %p178 = scmp.eq.s32.totalorder %s14, 0
      // Predicated region
      $region33: #{generator_forward.2} parent=31 // pred_check
        %p179 = pneg %p178
      $region34: #{generator_forward.2} parent=31 // pred_check_branch
        %181 = sbr.rel (%p179) target = $region36
      $region35: #{generator_forward.2} parent=31 // pred_region
        %vm182 = vcmask 261120
        %183 = vst.msk [vmem:[#allocation2] sm:$0xff] %vm182, 0.0
      $region36: #{generator_forward.2} parent=31 // pred_fallthru
        _
      %v184 = vld [vmem:[%s1] sm:$0xf]
      %v185 = vld [vmem:[%s1 + $0x4] sm:$0xf]
      %v186 = vld [vmem:[%s1 + $0x8] sm:$0xf]
      %v187 = vld [vmem:[%s1 + $0xc] sm:$0xf]
      %s188 = scalar_lea.vmem %s1, 16
      %v189 = vld [vmem:[%s188] sm:$0xf]
      %v190 = vld [vmem:[%s188 + $0x4] sm:$0xf]
      %v191 = vld [vmem:[%s188 + $0x8] sm:$0xf]
      %v192 = vld [vmem:[%s188 + $0xc] sm:$0xf]
      %s193 = scalar_lea.vmem %s1, 32
      %v194 = vld [vmem:[%s193] sm:$0xf]
      %v195 = vld [vmem:[%s193 + $0x4] sm:$0xf]
      %v196 = vld [vmem:[%s193 + $0x8] sm:$0xf]
      %v197 = vld [vmem:[%s193 + $0xc] sm:$0xf]
      %v198 = vld [vmem:[%s2] sm:$0x1]
      %v199 = vld [vmem:[#allocation2] sm:$0xff]
      %v200 = vpack.c.bf16 %v199, %v199
      %v205 = vunpack.c.l.b16 %v184
      %v206 = vunpack.c.l.b16 %v185
      %v207 = vunpack.c.l.b16 %v186
      %v208 = vunpack.c.l.b16 %v187
      %v209 = vpack.c.b16 %v206, %v205
      %v210 = vpack.c.b16 %v208, %v207
      %vm213 = vcmask 261120
      %v215 = vsel %vm213, %v200, 0
      %217 = vmatprep.subr.bf16.mxu0 0
      %218 = vmatpush1.bf16.msra.mxu0 %v209
      %219 = vmatprep.subr.bf16.mxu0 0
      %220 = vmatpush1.bf16.msra.mxu0 %v210
      %221 = vmatprep.subr.bf16.mxu0 0
      %222 = vmatpush1.bf16.msra.mxu0 0
      %223 = vmatprep.subr.bf16.mxu0 0
      %224 = vmatpush1.bf16.msra.mxu0 0
      %225 = vmatprep.subr.bf16.mxu0 0
      %226 = vmatpush1.bf16.msra.mxu0 0
      %227 = vmatprep.subr.bf16.mxu0 0
      %228 = vmatpush1.bf16.msra.mxu0 0
      %229 = vmatprep.subr.bf16.mxu0 0
      %230 = vmatpush1.bf16.msra.mxu0 0
      %231 = vmatprep.subr.bf16.mxu0 0
      %232 = vmatpush1.bf16.msra.mxu0 0
      %233 = vmatprep.subr.bf16.mxu0 0
      %234 = vmatpush1.bf16.msra.mxu0 0
      %235 = vmatprep.subr.bf16.mxu0 0
      %236 = vmatpush1.bf16.msra.mxu0 0
      %237 = vmatprep.subr.bf16.mxu0 0
      %238 = vmatpush1.bf16.msra.mxu0 0
      %239 = vmatprep.subr.bf16.mxu0 0
      %240 = vmatpush1.bf16.msra.mxu0 0
      %241 = vmatprep.subr.bf16.mxu0 0
      %242 = vmatpush1.bf16.msra.mxu0 0
      %243 = vmatprep.subr.bf16.mxu0 0
      %244 = vmatpush1.bf16.msra.mxu0 0
      %245 = vmatprep.subr.bf16.mxu0 0
      %246 = vmatpush1.bf16.msra.mxu0 0
      %247 = vmatprep.subr.bf16.mxu0 0
      %248 = vmatpush1.bf16.msra.mxu0 0
      %249 = vmatprep.mubr.bf16.mxu0 0
      %250 = vmatmul.mubr.bf16.gmra.mrb[0].mxu0 %v215
      %v251 = vpop.f32.mrb[0].mxu0
      %v252 = vadd.f32 0.0, %v251
      %v253 = vpop.f32.mrb[0].mxu0
      %v254 = vpop.f32.mrb[0].mxu0
      %v255 = vpop.f32.mrb[0].mxu0
      %256 = vdwg.mxu0
      %v261 = vunpack.c.l.b16 %v189
      %v262 = vunpack.c.l.b16 %v190
      %v263 = vunpack.c.l.b16 %v191
      %v264 = vunpack.c.l.b16 %v192
      %v265 = vpack.c.b16 %v262, %v261
      %v266 = vpack.c.b16 %v264, %v263
      %269 = vmatprep.subr.bf16.mxu0 0
      %270 = vmatpush1.bf16.msra.mxu0 %v265
      %271 = vmatprep.subr.bf16.mxu0 0
      %272 = vmatpush1.bf16.msra.mxu0 %v266
      %273 = vmatprep.subr.bf16.mxu0 0
      %274 = vmatpush1.bf16.msra.mxu0 0
      %275 = vmatprep.subr.bf16.mxu0 0
      %276 = vmatpush1.bf16.msra.mxu0 0
      %277 = vmatprep.subr.bf16.mxu0 0
      %278 = vmatpush1.bf16.msra.mxu0 0
      %279 = vmatprep.subr.bf16.mxu0 0
      %280 = vmatpush1.bf16.msra.mxu0 0
      %281 = vmatprep.subr.bf16.mxu0 0
      %282 = vmatpush1.bf16.msra.mxu0 0
      %283 = vmatprep.subr.bf16.mxu0 0
      %284 = vmatpush1.bf16.msra.mxu0 0
      %285 = vmatprep.subr.bf16.mxu0 0
      %286 = vmatpush1.bf16.msra.mxu0 0
      %287 = vmatprep.subr.bf16.mxu0 0
      %288 = vmatpush1.bf16.msra.mxu0 0
      %289 = vmatprep.subr.bf16.mxu0 0
      %290 = vmatpush1.bf16.msra.mxu0 0
      %291 = vmatprep.subr.bf16.mxu0 0
      %292 = vmatpush1.bf16.msra.mxu0 0
      %293 = vmatprep.subr.bf16.mxu0 0
      %294 = vmatpush1.bf16.msra.mxu0 0
      %295 = vmatprep.subr.bf16.mxu0 0
      %296 = vmatpush1.bf16.msra.mxu0 0
      %297 = vmatprep.subr.bf16.mxu0 0
      %298 = vmatpush1.bf16.msra.mxu0 0
      %299 = vmatprep.subr.bf16.mxu0 0
      %300 = vmatpush1.bf16.msra.mxu0 0
      %301 = vmatprep.mubr.bf16.mxu0 0
      %302 = vmatmul.mubr.bf16.gmra.mrb[0].mxu0 %v215
      %v303 = vpop.f32.mrb[0].mxu0
      %v304 = vadd.f32 0.0, %v303
      %v305 = vpop.f32.mrb[0].mxu0
      %v306 = vpop.f32.mrb[0].mxu0
      %v307 = vpop.f32.mrb[0].mxu0
      %308 = vdwg.mxu0
      %v310 = vlaneseq
      %v311 = vshrl.u32 %v310, 7
      %v312 = vsub.s32 0, %v311
      %v313 = vrot.slane %v198, %v312
      %v319 = vunpack.c.l.b16 %v194
      %v320 = vunpack.c.l.b16 %v195
      %v321 = vunpack.c.l.b16 %v196
      %v322 = vunpack.c.l.b16 %v197
      %v323 = vpack.c.b16 %v320, %v319
      %v324 = vpack.c.b16 %v322, %v321
      %327 = vmatprep.subr.bf16.mxu0 0
      %328 = vmatpush1.bf16.msra.mxu0 %v323
      %329 = vmatprep.subr.bf16.mxu0 0
      %330 = vmatpush1.bf16.msra.mxu0 %v324
      %331 = vmatprep.subr.bf16.mxu0 0
      %332 = vmatpush1.bf16.msra.mxu0 0
      %333 = vmatprep.subr.bf16.mxu0 0
      %334 = vmatpush1.bf16.msra.mxu0 0
      %335 = vmatprep.subr.bf16.mxu0 0
      %336 = vmatpush1.bf16.msra.mxu0 0
      %337 = vmatprep.subr.bf16.mxu0 0
      %338 = vmatpush1.bf16.msra.mxu0 0
      %339 = vmatprep.subr.bf16.mxu0 0
      %340 = vmatpush1.bf16.msra.mxu0 0
      %341 = vmatprep.subr.bf16.mxu0 0
      %342 = vmatpush1.bf16.msra.mxu0 0
      %343 = vmatprep.subr.bf16.mxu0 0
      %344 = vmatpush1.bf16.msra.mxu0 0
      %345 = vmatprep.subr.bf16.mxu0 0
      %346 = vmatpush1.bf16.msra.mxu0 0
      %347 = vmatprep.subr.bf16.mxu0 0
      %348 = vmatpush1.bf16.msra.mxu0 0
      %349 = vmatprep.subr.bf16.mxu0 0
      %350 = vmatpush1.bf16.msra.mxu0 0
      %351 = vmatprep.subr.bf16.mxu0 0
      %352 = vmatpush1.bf16.msra.mxu0 0
      %353 = vmatprep.subr.bf16.mxu0 0
      %354 = vmatpush1.bf16.msra.mxu0 0
      %355 = vmatprep.subr.bf16.mxu0 0
      %356 = vmatpush1.bf16.msra.mxu0 0
      %357 = vmatprep.subr.bf16.mxu0 0
      %358 = vmatpush1.bf16.msra.mxu0 0
      %359 = vmatprep.mubr.bf16.mxu0 0
      %360 = vmatmul.mubr.bf16.gmra.mrb[0].mxu0 %v215
      %v361 = vpop.f32.mrb[0].mxu0
      %v362 = vadd.f32 %v313, %v361
      %v363 = vpop.f32.mrb[0].mxu0
      %v364 = vpop.f32.mrb[0].mxu0
      %v365 = vpop.f32.mrb[0].mxu0
      %366 = vdwg.mxu0
      %v367 = vld [vmem:[%s169] sm:$0xff]
      %v368 = vld [vmem:[%s169 + $0x8] sm:$0xff]
      %v369 = vld [vmem:[%s169 + $0x10] sm:$0xff]
      %v370 = vadd.f32 %v367, %v252
      %v371 = vxor.u32 %v370, 2147483648
      %v372 = vmul.f32 %v371, 1.442695
      %v373 = vpow.pop %v372
      %v374 = vadd.f32 %v373, 1.0
      %v375 = vrcp.pop %v374
      %v376 = vmul.f32 1.0, %v375
      %v377 = vadd.f32 %v368, %v304
      %v378 = vxor.u32 %v377, 2147483648
      %v379 = vmul.f32 %v378, 1.442695
      %v380 = vpow.pop %v379
      %v381 = vadd.f32 %v380, 1.0
      %v382 = vrcp.pop %v381
      %v383 = vmul.f32 1.0, %v382
      %v384 = vmul.f32 %v376, %v362
      %v385 = vadd.f32 %v369, %v384
      %v386 = vtanh.pop %v385
      %v387 = vsub.f32 1.0, %v383
      %v388 = vmul.f32 %v387, %v386
      %v389 = vmul.f32 %v383, %v199
      %v390 = vadd.f32 %v388, %v389
      %391 = vst.msk [vmem:[#allocation2] sm:$0xff] %vm213, %v390
      %392 = vst.msk [vmem:[%s175] sm:$0xff] %vm213, %v390
      %v393 = vld [vmem:[#allocation2] sm:$0xff]
      %v394 = vpack.c.bf16 %v393, %v393
      %v396 = vsel %vm213, %v394, 0
      %398 = vmatprep.subr.bf16.mxu0 0
      %399 = vmatpush1.bf16.msra.mxu0 %v209
      %400 = vmatprep.subr.bf16.mxu0 0
      %401 = vmatpush1.bf16.msra.mxu0 %v210
      %402 = vmatprep.subr.bf16.mxu0 0
      %403 = vmatpush1.bf16.msra.mxu0 0
      %404 = vmatprep.subr.bf16.mxu0 0
      %405 = vmatpush1.bf16.msra.mxu0 0
      %406 = vmatprep.subr.bf16.mxu0 0
      %407 = vmatpush1.bf16.msra.mxu0 0
      %408 = vmatprep.subr.bf16.mxu0 0
      %409 = vmatpush1.bf16.msra.mxu0 0
      %410 = vmatprep.subr.bf16.mxu0 0
      %411 = vmatpush1.bf16.msra.mxu0 0
      %412 = vmatprep.subr.bf16.mxu0 0
      %413 = vmatpush1.bf16.msra.mxu0 0
      %414 = vmatprep.subr.bf16.mxu0 0
      %415 = vmatpush1.bf16.msra.mxu0 0
      %416 = vmatprep.subr.bf16.mxu0 0
      %417 = vmatpush1.bf16.msra.mxu0 0
      %418 = vmatprep.subr.bf16.mxu0 0
      %419 = vmatpush1.bf16.msra.mxu0 0
      %420 = vmatprep.subr.bf16.mxu0 0
      %421 = vmatpush1.bf16.msra.mxu0 0
      %422 = vmatprep.subr.bf16.mxu0 0
      %423 = vmatpush1.bf16.msra.mxu0 0
      %424 = vmatprep.subr.bf16.mxu0 0
      %425 = vmatpush1.bf16.msra.mxu0 0
      %426 = vmatprep.subr.bf16.mxu0 0
      %427 = vmatpush1.bf16.msra.mxu0 0
      %428 = vmatprep.subr.bf16.mxu0 0
      %429 = vmatpush1.bf16.msra.mxu0 0
      %430 = vmatprep.mubr.bf16.mxu0 0
      %431 = vmatmul.mubr.bf16.gmra.mrb[0].mxu0 %v396
      %v432 = vpop.f32.mrb[0].mxu0
      %v433 = vadd.f32 0.0, %v432
      %v434 = vpop.f32.mrb[0].mxu0
      %v435 = vpop.f32.mrb[0].mxu0
      %v436 = vpop.f32.mrb[0].mxu0
      %437 = vdwg.mxu0
      %438 = vmatprep.subr.bf16.mxu0 0
      %439 = vmatpush1.bf16.msra.mxu0 %v265
      %440 = vmatprep.subr.bf16.mxu0 0
      %441 = vmatpush1.bf16.msra.mxu0 %v266
      %442 = vmatprep.subr.bf16.mxu0 0
      %443 = vmatpush1.bf16.msra.mxu0 0
      %444 = vmatprep.subr.bf16.mxu0 0
      %445 = vmatpush1.bf16.msra.mxu0 0
      %446 = vmatprep.subr.bf16.mxu0 0
      %447 = vmatpush1.bf16.msra.mxu0 0
      %448 = vmatprep.subr.bf16.mxu0 0
      %449 = vmatpush1.bf16.msra.mxu0 0
      %450 = vmatprep.subr.bf16.mxu0 0
      %451 = vmatpush1.bf16.msra.mxu0 0
      %452 = vmatprep.subr.bf16.mxu0 0
      %453 = vmatpush1.bf16.msra.mxu0 0
      %454 = vmatprep.subr.bf16.mxu0 0
      %455 = vmatpush1.bf16.msra.mxu0 0
      %456 = vmatprep.subr.bf16.mxu0 0
      %457 = vmatpush1.bf16.msra.mxu0 0
      %458 = vmatprep.subr.bf16.mxu0 0
      %459 = vmatpush1.bf16.msra.mxu0 0
      %460 = vmatprep.subr.bf16.mxu0 0
      %461 = vmatpush1.bf16.msra.mxu0 0
      %462 = vmatprep.subr.bf16.mxu0 0
      %463 = vmatpush1.bf16.msra.mxu0 0
      %464 = vmatprep.subr.bf16.mxu0 0
      %465 = vmatpush1.bf16.msra.mxu0 0
      %466 = vmatprep.subr.bf16.mxu0 0
      %467 = vmatpush1.bf16.msra.mxu0 0
      %468 = vmatprep.subr.bf16.mxu0 0
      %469 = vmatpush1.bf16.msra.mxu0 0
      %470 = vmatprep.mubr.bf16.mxu0 0
      %471 = vmatmul.mubr.bf16.gmra.mrb[0].mxu0 %v396
      %v472 = vpop.f32.mrb[0].mxu0
      %v473 = vadd.f32 0.0, %v472
      %v474 = vpop.f32.mrb[0].mxu0
      %v475 = vpop.f32.mrb[0].mxu0
      %v476 = vpop.f32.mrb[0].mxu0
      %477 = vdwg.mxu0
      %478 = vmatprep.subr.bf16.mxu0 0
      %479 = vmatpush1.bf16.msra.mxu0 %v323
      %480 = vmatprep.subr.bf16.mxu0 0
      %481 = vmatpush1.bf16.msra.mxu0 %v324
      %482 = vmatprep.subr.bf16.mxu0 0
      %483 = vmatpush1.bf16.msra.mxu0 0
      %484 = vmatprep.subr.bf16.mxu0 0
      %485 = vmatpush1.bf16.msra.mxu0 0
      %486 = vmatprep.subr.bf16.mxu0 0
      %487 = vmatpush1.bf16.msra.mxu0 0
      %488 = vmatprep.subr.bf16.mxu0 0
      %489 = vmatpush1.bf16.msra.mxu0 0
      %490 = vmatprep.subr.bf16.mxu0 0
      %491 = vmatpush1.bf16.msra.mxu0 0
      %492 = vmatprep.subr.bf16.mxu0 0
      %493 = vmatpush1.bf16.msra.mxu0 0
      %494 = vmatprep.subr.bf16.mxu0 0
      %495 = vmatpush1.bf16.msra.mxu0 0
      %496 = vmatprep.subr.bf16.mxu0 0
      %497 = vmatpush1.bf16.msra.mxu0 0
      %498 = vmatprep.subr.bf16.mxu0 0
      %499 = vmatpush1.bf16.msra.mxu0 0
      %500 = vmatprep.subr.bf16.mxu0 0
      %501 = vmatpush1.bf16.msra.mxu0 0
      %502 = vmatprep.subr.bf16.mxu0 0
      %503 = vmatpush1.bf16.msra.mxu0 0
      %504 = vmatprep.subr.bf16.mxu0 0
      %505 = vmatpush1.bf16.msra.mxu0 0
      %506 = vmatprep.subr.bf16.mxu0 0
      %507 = vmatpush1.bf16.msra.mxu0 0
      %508 = vmatprep.subr.bf16.mxu0 0
      %509 = vmatpush1.bf16.msra.mxu0 0
      %510 = vmatprep.mubr.bf16.mxu0 0
      %511 = vmatmul.mubr.bf16.gmra.mrb[0].mxu0 %v396
      %v512 = vpop.f32.mrb[0].mxu0
      %v513 = vadd.f32 %v313, %v512
      %v514 = vpop.f32.mrb[0].mxu0
      %v515 = vpop.f32.mrb[0].mxu0
      %v516 = vpop.f32.mrb[0].mxu0
      %517 = vdwg.mxu0
      %s518 = scalar_lea.vmem %s169, 24
      %v519 = vld [vmem:[%s518] sm:$0xff]
      %v520 = vld [vmem:[%s518 + $0x8] sm:$0xff]
      %v521 = vld [vmem:[%s518 + $0x10] sm:$0xff]
      %v522 = vadd.f32 %v519, %v433
      %v523 = vxor.u32 %v522, 2147483648
      %v524 = vmul.f32 %v523, 1.442695
      %v525 = vpow.pop %v524
      %v526 = vadd.f32 %v525, 1.0
      %v527 = vrcp.pop %v526
      %v528 = vmul.f32 1.0, %v527
      %v529 = vadd.f32 %v520, %v473
      %v530 = vxor.u32 %v529, 2147483648
      %v531 = vmul.f32 %v530, 1.442695
      %v532 = vpow.pop %v531
      %v533 = vadd.f32 %v532, 1.0
      %v534 = vrcp.pop %v533
      %v535 = vmul.f32 1.0, %v534
      %v536 = vmul.f32 %v528, %v513
      %v537 = vadd.f32 %v521, %v536
      %v538 = vtanh.pop %v537
      %v539 = vsub.f32 1.0, %v535
      %v540 = vmul.f32 %v539, %v538
      %v541 = vmul.f32 %v535, %v393
      %v542 = vadd.f32 %v540, %v541
      %543 = vst.msk [vmem:[#allocation2] sm:$0xff] %vm213, %v542
      %s544 = scalar_lea.vmem %s175, 8
      %545 = vst.msk [vmem:[%s544] sm:$0xff] %vm213, %v542
      %v546 = vld [vmem:[#allocation2] sm:$0xff]
      %v547 = vpack.c.bf16 %v546, %v546
      %v549 = vsel %vm213, %v547, 0
      %551 = vmatprep.subr.bf16.mxu0 0
      %552 = vmatpush1.bf16.msra.mxu0 %v209
      %553 = vmatprep.subr.bf16.mxu0 0
      %554 = vmatpush1.bf16.msra.mxu0 %v210
      %555 = vmatprep.subr.bf16.mxu0 0
      %556 = vmatpush1.bf16.msra.mxu0 0
      %557 = vmatprep.subr.bf16.mxu0 0
      %558 = vmatpush1.bf16.msra.mxu0 0
      %559 = vmatprep.subr.bf16.mxu0 0
      %560 = vmatpush1.bf16.msra.mxu0 0
      %561 = vmatprep.subr.bf16.mxu0 0
      %562 = vmatpush1.bf16.msra.mxu0 0
      %563 = vmatprep.subr.bf16.mxu0 0
      %564 = vmatpush1.bf16.msra.mxu0 0
      %565 = vmatprep.subr.bf16.mxu0 0
      %566 = vmatpush1.bf16.msra.mxu0 0
      %567 = vmatprep.subr.bf16.mxu0 0
      %568 = vmatpush1.bf16.msra.mxu0 0
      %569 = vmatprep.subr.bf16.mxu0 0
      %570 = vmatpush1.bf16.msra.mxu0 0
      %571 = vmatprep.subr.bf16.mxu0 0
      %572 = vmatpush1.bf16.msra.mxu0 0
      %573 = vmatprep.subr.bf16.mxu0 0
      %574 = vmatpush1.bf16.msra.mxu0 0
      %575 = vmatprep.subr.bf16.mxu0 0
      %576 = vmatpush1.bf16.msra.mxu0 0
      %577 = vmatprep.subr.bf16.mxu0 0
      %578 = vmatpush1.bf16.msra.mxu0 0
      %579 = vmatprep.subr.bf16.mxu0 0
      %580 = vmatpush1.bf16.msra.mxu0 0
      %581 = vmatprep.subr.bf16.mxu0 0
      %582 = vmatpush1.bf16.msra.mxu0 0
      %583 = vmatprep.mubr.bf16.mxu0 0
      %584 = vmatmul.mubr.bf16.gmra.mrb[0].mxu0 %v549
      %v585 = vpop.f32.mrb[0].mxu0
      %v586 = vadd.f32 0.0, %v585
      %v587 = vpop.f32.mrb[0].mxu0
      %v588 = vpop.f32.mrb[0].mxu0
      %v589 = vpop.f32.mrb[0].mxu0
      %590 = vdwg.mxu0
      %591 = vmatprep.subr.bf16.mxu0 0
      %592 = vmatpush1.bf16.msra.mxu0 %v265
      %593 = vmatprep.subr.bf16.mxu0 0
      %594 = vmatpush1.bf16.msra.mxu0 %v266
      %595 = vmatprep.subr.bf16.mxu0 0
      %596 = vmatpush1.bf16.msra.mxu0 0
      %597 = vmatprep.subr.bf16.mxu0 0
      %598 = vmatpush1.bf16.msra.mxu0 0
      %599 = vmatprep.subr.bf16.mxu0 0
      %600 = vmatpush1.bf16.msra.mxu0 0
      %601 = vmatprep.subr.bf16.mxu0 0
      %602 = vmatpush1.bf16.msra.mxu0 0
      %603 = vmatprep.subr.bf16.mxu0 0
      %604 = vmatpush1.bf16.msra.mxu0 0
      %605 = vmatprep.subr.bf16.mxu0 0
      %606 = vmatpush1.bf16.msra.mxu0 0
      %607 = vmatprep.subr.bf16.mxu0 0
      %608 = vmatpush1.bf16.msra.mxu0 0
      %609 = vmatprep.subr.bf16.mxu0 0
      %610 = vmatpush1.bf16.msra.mxu0 0
      %611 = vmatprep.subr.bf16.mxu0 0
      %612 = vmatpush1.bf16.msra.mxu0 0
      %613 = vmatprep.subr.bf16.mxu0 0
      %614 = vmatpush1.bf16.msra.mxu0 0
      %615 = vmatprep.subr.bf16.mxu0 0
      %616 = vmatpush1.bf16.msra.mxu0 0
      %617 = vmatprep.subr.bf16.mxu0 0
      %618 = vmatpush1.bf16.msra.mxu0 0
      %619 = vmatprep.subr.bf16.mxu0 0
      %620 = vmatpush1.bf16.msra.mxu0 0
      %621 = vmatprep.subr.bf16.mxu0 0
      %622 = vmatpush1.bf16.msra.mxu0 0
      %623 = vmatprep.mubr.bf16.mxu0 0
      %624 = vmatmul.mubr.bf16.gmra.mrb[0].mxu0 %v549
      %v625 = vpop.f32.mrb[0].mxu0
      %v626 = vadd.f32 0.0, %v625
      %v627 = vpop.f32.mrb[0].mxu0
      %v628 = vpop.f32.mrb[0].mxu0
      %v629 = vpop.f32.mrb[0].mxu0
      %630 = vdwg.mxu0
      %631 = vmatprep.subr.bf16.mxu0 0
      %632 = vmatpush1.bf16.msra.mxu0 %v323
      %633 = vmatprep.subr.bf16.mxu0 0
      %634 = vmatpush1.bf16.msra.mxu0 %v324
      %635 = vmatprep.subr.bf16.mxu0 0
      %636 = vmatpush1.bf16.msra.mxu0 0
      %637 = vmatprep.subr.bf16.mxu0 0
      %638 = vmatpush1.bf16.msra.mxu0 0
      %639 = vmatprep.subr.bf16.mxu0 0
      %640 = vmatpush1.bf16.msra.mxu0 0
      %641 = vmatprep.subr.bf16.mxu0 0
      %642 = vmatpush1.bf16.msra.mxu0 0
      %643 = vmatprep.subr.bf16.mxu0 0
      %644 = vmatpush1.bf16.msra.mxu0 0
      %645 = vmatprep.subr.bf16.mxu0 0
      %646 = vmatpush1.bf16.msra.mxu0 0
      %647 = vmatprep.subr.bf16.mxu0 0
      %648 = vmatpush1.bf16.msra.mxu0 0
      %649 = vmatprep.subr.bf16.mxu0 0
      %650 = vmatpush1.bf16.msra.mxu0 0
      %651 = vmatprep.subr.bf16.mxu0 0
      %652 = vmatpush1.bf16.msra.mxu0 0
      %653 = vmatprep.subr.bf16.mxu0 0
      %654 = vmatpush1.bf16.msra.mxu0 0
      %655 = vmatprep.subr.bf16.mxu0 0
      %656 = vmatpush1.bf16.msra.mxu0 0
      %657 = vmatprep.subr.bf16.mxu0 0
      %658 = vmatpush1.bf16.msra.mxu0 0
      %659 = vmatprep.subr.bf16.mxu0 0
      %660 = vmatpush1.bf16.msra.mxu0 0
      %661 = vmatprep.subr.bf16.mxu0 0
      %662 = vmatpush1.bf16.msra.mxu0 0
      %663 = vmatprep.mubr.bf16.mxu0 0
      %664 = vmatmul.mubr.bf16.gmra.mrb[0].mxu0 %v549
      %v665 = vpop.f32.mrb[0].mxu0
      %v666 = vadd.f32 %v313, %v665
      %v667 = vpop.f32.mrb[0].mxu0
      %v668 = vpop.f32.mrb[0].mxu0
      %v669 = vpop.f32.mrb[0].mxu0
      %670 = vdwg.mxu0
      %s671 = scalar_lea.vmem %s169, 48
      %v672 = vld [vmem:[%s671] sm:$0xff]
      %v673 = vld [vmem:[%s671 + $0x8] sm:$0xff]
      %v674 = vld [vmem:[%s671 + $0x10] sm:$0xff]
      %v675 = vadd.f32 %v672, %v586
      %v676 = vxor.u32 %v675, 2147483648
      %v677 = vmul.f32 %v676, 1.442695
      %v678 = vpow.pop %v677
      %v679 = vadd.f32 %v678, 1.0
      %v680 = vrcp.pop %v679
      %v681 = vmul.f32 1.0, %v680
      %v682 = vadd.f32 %v673, %v626
      %v683 = vxor.u32 %v682, 2147483648
      %v684 = vmul.f32 %v683, 1.442695
      %v685 = vpow.pop %v684
      %v686 = vadd.f32 %v685, 1.0
      %v687 = vrcp.pop %v686
      %v688 = vmul.f32 1.0, %v687
      %v689 = vmul.f32 %v681, %v666
      %v690 = vadd.f32 %v674, %v689
      %v691 = vtanh.pop %v690
      %v692 = vsub.f32 1.0, %v688
      %v693 = vmul.f32 %v692, %v691
      %v694 = vmul.f32 %v688, %v546
      %v695 = vadd.f32 %v693, %v694
      %696 = vst.msk [vmem:[#allocation2] sm:$0xff] %vm213, %v695
      %s697 = scalar_lea.vmem %s175, 16
      %698 = vst.msk [vmem:[%s697] sm:$0xff] %vm213, %v695
      %v699 = vld [vmem:[#allocation2] sm:$0xff]
      %v700 = vpack.c.bf16 %v699, %v699
      %v702 = vsel %vm213, %v700, 0
      %704 = vmatprep.subr.bf16.mxu0 0
      %705 = vmatpush1.bf16.msra.mxu0 %v209
      %706 = vmatprep.subr.bf16.mxu0 0
      %707 = vmatpush1.bf16.msra.mxu0 %v210
      %708 = vmatprep.subr.bf16.mxu0 0
      %709 = vmatpush1.bf16.msra.mxu0 0
      %710 = vmatprep.subr.bf16.mxu0 0
      %711 = vmatpush1.bf16.msra.mxu0 0
      %712 = vmatprep.subr.bf16.mxu0 0
      %713 = vmatpush1.bf16.msra.mxu0 0
      %714 = vmatprep.subr.bf16.mxu0 0
      %715 = vmatpush1.bf16.msra.mxu0 0
      %716 = vmatprep.subr.bf16.mxu0 0
      %717 = vmatpush1.bf16.msra.mxu0 0
      %718 = vmatprep.subr.bf16.mxu0 0
      %719 = vmatpush1.bf16.msra.mxu0 0
      %720 = vmatprep.subr.bf16.mxu0 0
      %721 = vmatpush1.bf16.msra.mxu0 0
      %722 = vmatprep.subr.bf16.mxu0 0
      %723 = vmatpush1.bf16.msra.mxu0 0
      %724 = vmatprep.subr.bf16.mxu0 0
      %725 = vmatpush1.bf16.msra.mxu0 0
      %726 = vmatprep.subr.bf16.mxu0 0
      %727 = vmatpush1.bf16.msra.mxu0 0
      %728 = vmatprep.subr.bf16.mxu0 0
      %729 = vmatpush1.bf16.msra.mxu0 0
      %730 = vmatprep.subr.bf16.mxu0 0
      %731 = vmatpush1.bf16.msra.mxu0 0
      %732 = vmatprep.subr.bf16.mxu0 0
      %733 = vmatpush1.bf16.msra.mxu0 0
      %734 = vmatprep.subr.bf16.mxu0 0
      %735 = vmatpush1.bf16.msra.mxu0 0
      %736 = vmatprep.mubr.bf16.mxu0 0
      %737 = vmatmul.mubr.bf16.gmra.mrb[0].mxu0 %v702
      %v738 = vpop.f32.mrb[0].mxu0
      %v739 = vadd.f32 0.0, %v738
      %v740 = vpop.f32.mrb[0].mxu0
      %v741 = vpop.f32.mrb[0].mxu0
      %v742 = vpop.f32.mrb[0].mxu0
      %743 = vdwg.mxu0
      %744 = vmatprep.subr.bf16.mxu0 0
      %745 = vmatpush1.bf16.msra.mxu0 %v265
      %746 = vmatprep.subr.bf16.mxu0 0
      %747 = vmatpush1.bf16.msra.mxu0 %v266
      %748 = vmatprep.subr.bf16.mxu0 0
      %749 = vmatpush1.bf16.msra.mxu0 0
      %750 = vmatprep.subr.bf16.mxu0 0
      %751 = vmatpush1.bf16.msra.mxu0 0
      %752 = vmatprep.subr.bf16.mxu0 0
      %753 = vmatpush1.bf16.msra.mxu0 0
      %754 = vmatprep.subr.bf16.mxu0 0
      %755 = vmatpush1.bf16.msra.mxu0 0
      %756 = vmatprep.subr.bf16.mxu0 0
      %757 = vmatpush1.bf16.msra.mxu0 0
      %758 = vmatprep.subr.bf16.mxu0 0
      %759 = vmatpush1.bf16.msra.mxu0 0
      %760 = vmatprep.subr.bf16.mxu0 0
      %761 = vmatpush1.bf16.msra.mxu0 0
      %762 = vmatprep.subr.bf16.mxu0 0
      %763 = vmatpush1.bf16.msra.mxu0 0
      %764 = vmatprep.subr.bf16.mxu0 0
      %765 = vmatpush1.bf16.msra.mxu0 0
      %766 = vmatprep.subr.bf16.mxu0 0
      %767 = vmatpush1.bf16.msra.mxu0 0
      %768 = vmatprep.subr.bf16.mxu0 0
      %769 = vmatpush1.bf16.msra.mxu0 0
      %770 = vmatprep.subr.bf16.mxu0 0
      %771 = vmatpush1.bf16.msra.mxu0 0
      %772 = vmatprep.subr.bf16.mxu0 0
      %773 = vmatpush1.bf16.msra.mxu0 0
      %774 = vmatprep.subr.bf16.mxu0 0
      %775 = vmatpush1.bf16.msra.mxu0 0
      %776 = vmatprep.mubr.bf16.mxu0 0
      %777 = vmatmul.mubr.bf16.gmra.mrb[0].mxu0 %v702
      %v778 = vpop.f32.mrb[0].mxu0
      %v779 = vadd.f32 0.0, %v778
      %v780 = vpop.f32.mrb[0].mxu0
      %v781 = vpop.f32.mrb[0].mxu0
      %v782 = vpop.f32.mrb[0].mxu0
      %783 = vdwg.mxu0
      %784 = vmatprep.subr.bf16.mxu0 0
      %785 = vmatpush1.bf16.msra.mxu0 %v323
      %786 = vmatprep.subr.bf16.mxu0 0
      %787 = vmatpush1.bf16.msra.mxu0 %v324
      %788 = vmatprep.subr.bf16.mxu0 0
      %789 = vmatpush1.bf16.msra.mxu0 0
      %790 = vmatprep.subr.bf16.mxu0 0
      %791 = vmatpush1.bf16.msra.mxu0 0
      %792 = vmatprep.subr.bf16.mxu0 0
      %793 = vmatpush1.bf16.msra.mxu0 0
      %794 = vmatprep.subr.bf16.mxu0 0
      %795 = vmatpush1.bf16.msra.mxu0 0
      %796 = vmatprep.subr.bf16.mxu0 0
      %797 = vmatpush1.bf16.msra.mxu0 0
      %798 = vmatprep.subr.bf16.mxu0 0
      %799 = vmatpush1.bf16.msra.mxu0 0
      %800 = vmatprep.subr.bf16.mxu0 0
      %801 = vmatpush1.bf16.msra.mxu0 0
      %802 = vmatprep.subr.bf16.mxu0 0
      %803 = vmatpush1.bf16.msra.mxu0 0
      %804 = vmatprep.subr.bf16.mxu0 0
      %805 = vmatpush1.bf16.msra.mxu0 0
      %806 = vmatprep.subr.bf16.mxu0 0
      %807 = vmatpush1.bf16.msra.mxu0 0
      %808 = vmatprep.subr.bf16.mxu0 0
      %809 = vmatpush1.bf16.msra.mxu0 0
      %810 = vmatprep.subr.bf16.mxu0 0
      %811 = vmatpush1.bf16.msra.mxu0 0
      %812 = vmatprep.subr.bf16.mxu0 0
      %813 = vmatpush1.bf16.msra.mxu0 0
      %814 = vmatprep.subr.bf16.mxu0 0
      %815 = vmatpush1.bf16.msra.mxu0 0
      %816 = vmatprep.mubr.bf16.mxu0 0
      %817 = vmatmul.mubr.bf16.gmra.mrb[0].mxu0 %v702
      %v818 = vpop.f32.mrb[0].mxu0
      %v819 = vadd.f32 %v313, %v818
      %v820 = vpop.f32.mrb[0].mxu0
      %v821 = vpop.f32.mrb[0].mxu0
      %v822 = vpop.f32.mrb[0].mxu0
      %823 = vdwg.mxu0
      %s824 = scalar_lea.vmem %s169, 72
      %v825 = vld [vmem:[%s824] sm:$0xff]
      %v826 = vld [vmem:[%s824 + $0x8] sm:$0xff]
      %v827 = vld [vmem:[%s824 + $0x10] sm:$0xff]
      %v828 = vadd.f32 %v825, %v739
      %v829 = vxor.u32 %v828, 2147483648
      %v830 = vmul.f32 %v829, 1.442695
      %v831 = vpow.pop %v830
      %v832 = vadd.f32 %v831, 1.0
      %v833 = vrcp.pop %v832
      %v834 = vmul.f32 1.0, %v833
      %v835 = vadd.f32 %v826, %v779
      %v836 = vxor.u32 %v835, 2147483648
      %v837 = vmul.f32 %v836, 1.442695
      %v838 = vpow.pop %v837
      %v839 = vadd.f32 %v838, 1.0
      %v840 = vrcp.pop %v839
      %v841 = vmul.f32 1.0, %v840
      %v842 = vmul.f32 %v834, %v819
      %v843 = vadd.f32 %v827, %v842
      %v844 = vtanh.pop %v843
      %v845 = vsub.f32 1.0, %v841
      %v846 = vmul.f32 %v845, %v844
      %v847 = vmul.f32 %v841, %v699
      %v848 = vadd.f32 %v846, %v847
      %849 = vst.msk [vmem:[#allocation2] sm:$0xff] %vm213, %v848
      %s850 = scalar_lea.vmem %s175, 24
      %851 = vst.msk [vmem:[%s850] sm:$0xff] %vm213, %v848
      %s852 = smul.u32 4, %s14
      %p853 = scmp.lt.s32.totalorder %s852, 7
      %s854 = scalar_select %p853, %s852, 7
      %s855 = smul.addr %s854, 8
      %s856 = scalar_lea.vmem %s3, %s855
      // Predicated region
      $region37: #{generator_forward.2} parent=31 // pred_check
        %p857 = pneg %p100
      $region38: #{generator_forward.2} parent=31 // pred_check_branch
        %859 = sbr.rel (%p857) target = $region40
      $region39: #{generator_forward.2} parent=31 // pred_region
        %s860 = smul.u32 4, %s14
      $region40: #{generator_forward.2} parent=31 // pred_fallthru
        _
    $region32: #{generator_forward.2} parent=5 // pred_fallthru
      _
    %p861 = scmp.le.s32.totalorder 2, %s9
    // Predicated region
    $region41: #{generator_forward.2} parent=5 // pred_check
      %p862 = pneg %p861
    $region42: #{generator_forward.2} parent=5 // pred_check_branch
      %864 = sbr.rel (%p862) target = $region44
    $region43: #{generator_forward.2} parent=5 // pred_region
      %s865 = ssub.s32 %s9, 2
      // Predicated region
      $region45: #{generator_forward.2} parent=43 // pred_check
        %p866 = pneg %p106
      $region46: #{generator_forward.2} parent=43 // pred_check_branch
        %868 = sbr.rel (%p866) target = $region48
      $region47: #{generator_forward.2} parent=43 // pred_region
        %s869 = smul.u32 4, %s15
        %p870 = scmp.lt.s32.totalorder %s869, 7
        %s871 = scalar_select %p870, %s869, 7
        %s872 = smul.addr %s871, 8
        %s873 = scalar_lea.vmem %s3, %s872
      $region48: #{generator_forward.2} parent=43 // pred_fallthru
        _
    $region44: #{generator_forward.2} parent=5 // pred_fallthru
      _
  $region6: #{generator_forward.2} parent=0 // loop_footer
    %s13 = sadd.s32 1, %s9
  $region7: #{generator_forward.2} parent=0 // loop_footer_branch
    %8 = sbr.rel target = $region3
  $region8: #{generator_forward.2} parent=0 // loop_exit
    _

</llo_original>
